<compile_context>
chip_gen: v6e
topology: v6e:2x2x1
jax: 0.10.0
libtpu: 0.0.40
codegen_flags: <defaults>
</compile_context>

<pallas_src>
import numpy as np
import jax
import jax.numpy as jnp
from jax.experimental import pallas as pl

INSIDE_DIMS = (64, 8)   # default inside_dims of PermInvModel
DTYPE = jnp.float32


def _pad8(r):
    return -(-r // 8) * 8


# ----------------------------------------------------------------------------
# One-time host-side weight re-layout + packing (NOT in the per-call path).
# ----------------------------------------------------------------------------
def prepare_weights(mini_weights, rho_w, rho_b, dims, layer_out,
                    inside_dims=INSIDE_DIMS):
    H1, H2 = inside_dims
    L = len(dims)
    C = int(np.asarray(rho_w).shape[1])

    WA = max(layer_out[i] * H1 for i in range(L))               # stage-1 slab width
    WB = max([layer_out[i] * H2 for i in range(L)] + [L * H2])  # stage-2 slab width

    a_rows, b_rows = [], []
    offA, offB = {}, {}

    def add(rows, off_map, cursor, name, m, width):
        r, c = m.shape
        buf = np.zeros((_pad8(r), width), np.float32)
        buf[:r, :c] = m
        off_map[name] = cursor
        rows.append(buf)
        return cursor + buf.shape[0]

    a_cur = b_cur = 0
    for i, (w1, b1, w2, b2) in enumerate(mini_weights):
        n = layer_out[i]
        F = dims[i] + 1
        w1 = np.asarray(w1, np.float32)
        b1 = np.asarray(b1, np.float32)
        w2 = np.asarray(w2, np.float32)
        b2 = np.asarray(b2, np.float32)
        if i == 0:
            assert w1.shape[0] == F, w1.shape
        else:
            # PermInvModel sizes the rep part of w1 as H2*dims[i]; the forward only
            # works when the target net is chained, i.e. layer_out[i-1] == dims[i].
            assert layer_out[i - 1] == dims[i], (
                "PermInvModel requires chained layer geometry "
                "(layer_out[i-1] == dims[i])")
            assert w1.shape[0] == F + layer_out[i - 1] * H2, w1.shape

        w1p = w1[:F, :]                                      # [F, H1]
        w1bd = np.zeros((n * F, n * H1), np.float32)         # block-diag over neurons
        for j in range(n):
            w1bd[j * F:(j + 1) * F, j * H1:(j + 1) * H1] = w1p
        a_cur = add(a_rows, offA, a_cur, f"w1bd_{i}", w1bd, WA)
        a_cur = add(a_rows, offA, a_cur, f"b1t_{i}", np.tile(b1, (1, n)), WA)
        if i > 0:
            w1rep = w1[F:, :]                                # [n_prev*H2, H1] natural flat order
            a_cur = add(a_rows, offA, a_cur, f"w1rep_{i}", np.tile(w1rep, (1, n)), WA)

        w2bd = np.zeros((n * H1, n * H2), np.float32)        # block-diag over neurons
        for j in range(n):
            w2bd[j * H1:(j + 1) * H1, j * H2:(j + 1) * H2] = w2
        b_cur = add(b_rows, offB, b_cur, f"w2bd_{i}", w2bd, WB)
        b_cur = add(b_rows, offB, b_cur, f"b2t_{i}", np.tile(b2, (1, n)), WB)

        # Sums over neurons AND places the layer's rep at lane offset i*H2 of the
        # [B, L*H2] reps slab so rho becomes one final dot.
        rp = np.zeros((n * H2, L * H2), np.float32)
        for j in range(n):
            rp[j * H2:(j + 1) * H2, i * H2:(i + 1) * H2] = np.eye(H2, dtype=np.float32)
        b_cur = add(b_rows, offB, b_cur, f"R_{i}", rp, WB)

    b_cur = add(b_rows, offB, b_cur, "rho_w", np.asarray(rho_w, np.float32), WB)
    b_cur = add(b_rows, offB, b_cur, "rho_b", np.asarray(rho_b, np.float32), WB)

    slab_a = jnp.asarray(np.concatenate(a_rows, axis=0))      # [~224, 384] f32
    slab_b = jnp.asarray(np.concatenate(b_rows, axis=0))      # [~1136, 48] f32
    meta = dict(dims=tuple(int(d) for d in dims),
                layer_out=tuple(int(n) for n in layer_out),
                H1=H1, H2=H2, C=C, L=L, offA=offA, offB=offB)
    return slab_a, slab_b, meta


# ----------------------------------------------------------------------------
# Fused kernel: whole batch, all mini-MLPs + rho, single invocation.
# ----------------------------------------------------------------------------
def _make_kernel(meta):
    dims, layer_out = meta["dims"], meta["layer_out"]
    H1, H2, C, L = meta["H1"], meta["H2"], meta["C"], meta["L"]
    offA, offB = meta["offA"], meta["offB"]
    f32 = jnp.float32

    def kernel(*refs):
        p_refs = refs[:L]                 # params[i] flattened to [B, n_i*F_i]
        a_ref = refs[L]                   # stage-1 weight slab
        b_ref = refs[L + 1]               # stage-2 / rho weight slab
        out_ref = refs[L + 2]             # [B, C]

        reps = None                       # [B, L*H2] accumulator (stays in vregs)
        prev = None                       # [B, n_prev*H2] previous layer's outputs
        prev_n = 0
        for i in range(L):
            n = layer_out[i]
            F = dims[i] + 1
            wa = n * H1
            wb = n * H2

            x = p_refs[i][...]                                          # [B, n*F]
            o = offA[f"w1bd_{i}"]
            pre = jnp.dot(x, a_ref[pl.ds(o, n * F), pl.ds(0, wa)],
                          preferred_element_type=f32)                   # [B, n*H1]
            o = offA[f"b1t_{i}"]
            pre = pre + a_ref[pl.ds(o, 1), pl.ds(0, wa)]
            if i > 0:
                # Single contraction replaces the old per-previous-neuron dot loop.
                o = offA[f"w1rep_{i}"]
                pre = pre + jnp.dot(prev, a_ref[pl.ds(o, prev_n * H2), pl.ds(0, wa)],
                                    preferred_element_type=f32)
            h = jnp.maximum(pre, 0.0)                                   # ReLU

            o = offB[f"w2bd_{i}"]
            p = jnp.dot(h, b_ref[pl.ds(o, wa), pl.ds(0, wb)],
                        preferred_element_type=f32)
            o = offB[f"b2t_{i}"]
            p = jnp.maximum(p + b_ref[pl.ds(o, 1), pl.ds(0, wb)], 0.0)  # [B, n*H2]
            # TODO(synk): nn.Dropout(0.5) is identity in eval mode; training-mode
            # dropout (RNG masking) is intentionally not implemented.

            o = offB[f"R_{i}"]
            contrib = jnp.dot(p, b_ref[pl.ds(o, wb), pl.ds(0, L * H2)],
                              preferred_element_type=f32)               # [B, L*H2]
            reps = contrib if reps is None else reps + contrib
            prev = p
            prev_n = n

        o = offB["rho_w"]
        logits = jnp.dot(reps, b_ref[pl.ds(o, L * H2), pl.ds(0, C)],
                         preferred_element_type=f32)
        o = offB["rho_b"]
        logits = logits + b_ref[pl.ds(o, 1), pl.ds(0, C)]
        out_ref[...] = logits.astype(out_ref.dtype)                     # one full store

    return kernel


def perm_inv_forward(params, slab_a, slab_b, meta):
    """Batched forward: params[i] is [B, n_i, dims[i]+1]; returns [B, n_classes]."""
    B = params[0].shape[0]
    flat = [jnp.reshape(p, (B, -1)) for p in params]   # contiguous reshape → free
    kernel = _make_kernel(meta)
    # Gridless call: all (small) operands whole-array resident in VMEM, one shot.
    return pl.pallas_call(
        kernel,
        out_shape=jax.ShapeDtypeStruct((B, meta["C"]), DTYPE),
    )(*flat, slab_a, slab_b)


# ----------------------------------------------------------------------------
# Deterministic parameter construction (same layout as the PyTorch module,
# weights stored as [in_features, out_features]).
# ----------------------------------------------------------------------------
def init_perm_inv_params(key, dims, inside_dims=INSIDE_DIMS, n_classes=2):
    if n_classes == 2:
        n_classes = 1
    mini_weights = []
    prev_layer = 0
    for i, dim in enumerate(dims):
        if i > 0:
            prev_layer = inside_dims[-1] * dim
        in_dim = prev_layer + 1 + dim
        key, k1, k2, k3, k4 = jax.random.split(key, 5)
        w1 = jax.random.normal(k1, (in_dim, inside_dims[0]), DTYPE) * 0.1
        b1 = jax.random.normal(k2, (1, inside_dims[0]), DTYPE) * 0.1
        w2 = jax.random.normal(k3, (inside_dims[0], inside_dims[1]), DTYPE) * 0.1
        b2 = jax.random.normal(k4, (1, inside_dims[1]), DTYPE) * 0.1
        mini_weights.append((w1, b1, w2, b2))
    key, k5, k6 = jax.random.split(key, 3)
    final_act = inside_dims[-1] * len(dims)
    rho_w = jax.random.normal(k5, (final_act, n_classes), DTYPE) * 0.1
    rho_b = jax.random.normal(k6, (1, n_classes), DTYPE) * 0.1
    return mini_weights, rho_w, rho_b


# ----------------------------------------------------------------------------
# Pure-JAX reference (original concat-based formulation) for verification.
# ----------------------------------------------------------------------------
def reference_forward(params, mini_weights, rho_w, rho_b):
    reps = []
    prev = None
    for param, (w1, b1, w2, b2) in zip(params, mini_weights):
        if prev is None:
            pe = param
        else:
            rep_prev = jnp.broadcast_to(
                prev, (param.shape[0], param.shape[1], prev.shape[-1]))
            pe = jnp.concatenate([param, rep_prev], axis=-1)
        h = jnp.maximum(pe @ w1 + b1, 0.0)
        p = jnp.maximum(h @ w2 + b2, 0.0)
        reps.append(jnp.sum(p, axis=-2))
        prev = p.reshape(p.shape[0], 1, -1)
    reps_c = jnp.concatenate(reps, axis=1)
    return reps_c @ rho_w + rho_b


# ----------------------------------------------------------------------------
if __name__ == "__main__":
    # Target model geometry: dims[i] = input width of target layer i.
    # Layer widths 4 -> 6 -> 6 -> 3  =>  dims = [4, 6, 6], neurons = [6, 6, 3].
    dims = [4, 6, 6]
    layer_out = [6, 6, 3]
    B = 2

    key = jax.random.PRNGKey(0)
    key, kw = jax.random.split(key)
    mini_weights, rho_w, rho_b = init_perm_inv_params(kw, dims)

    # One-time weight re-layout + packing (outside the per-call path).
    slab_a, slab_b, meta = prepare_weights(mini_weights, rho_w, rho_b, dims, layer_out)

    # params[i]: [B, n_i, dims[i] + 1]   (weights + bias per neuron)
    params = []
    for d, n in zip(dims, layer_out):
        key, kp = jax.random.split(key)
        params.append(jax.random.normal(kp, (B, n, d + 1), DTYPE))

    fwd = jax.jit(lambda p0, p1, p2, sa, sb:
                  perm_inv_forward((p0, p1, p2), sa, sb, meta))
    logits = jax.block_until_ready(fwd(params[0], params[1], params[2], slab_a, slab_b))

    ref = reference_forward(params, mini_weights, rho_w, rho_b)
    assert logits.shape == (B, 1), logits.shape
    assert jnp.allclose(logits, ref, rtol=1e-4, atol=1e-4), (logits, ref)

    print("KERNEL_OK")
</pallas_src>

<mosaic_0001>
module attributes {stable_mosaic.version = 11 : i64} {
  func.func @kernel(%arg0: memref<2x30xf32, #tpu.memory_space<vmem>>, %arg1: memref<2x42xf32, #tpu.memory_space<vmem>>, %arg2: memref<2x21xf32, #tpu.memory_space<vmem>>, %arg3: memref<224x384xf32, #tpu.memory_space<vmem>>, %arg4: memref<1136x48xf32, #tpu.memory_space<vmem>>, %arg5: memref<2x1xf32, #tpu.memory_space<vmem>>) attributes {dimension_semantics = [], scalar_prefetch = 0 : i64, scratch_operands = 0 : i64, tpu.core_type = #tpu.core_type<tc>} {
    %c0 = arith.constant 0 : index
    %c0_0 = arith.constant 0 : index
    %0 = vector.load %arg0[%c0, %c0_0] : memref<2x30xf32, #tpu.memory_space<vmem>>, vector<2x30xf32>
    %c0_1 = arith.constant 0 : index
    %c0_2 = arith.constant 0 : index
    %1 = vector.load %arg3[%c0_1, %c0_2] : memref<224x384xf32, #tpu.memory_space<vmem>>, vector<30x384xf32>
    %cst = arith.constant dense<0.000000e+00> : vector<2x384xf32>
    %2 = tpu.matmul %0, %1, %cst {dimension_numbers = #tpu.dot_dimension_numbers<[1], [0], [0], [1], [0, 0, 1, 1], [], []>} : vector<2x30xf32>, vector<30x384xf32>, vector<2x384xf32> -> vector<2x384xf32>
    %c32 = arith.constant 32 : index
    %c0_3 = arith.constant 0 : index
    %3 = vector.load %arg3[%c32, %c0_3] : memref<224x384xf32, #tpu.memory_space<vmem>>, vector<1x384xf32>
    %4 = vector.broadcast %3 : vector<1x384xf32> to vector<2x384xf32>
    %5 = arith.addf %2, %4 : vector<2x384xf32>
    %cst_4 = arith.constant 0.000000e+00 : f32
    %6 = vector.broadcast %cst_4 : f32 to vector<2x384xf32>
    %7 = arith.maximumf %5, %6 : vector<2x384xf32>
    %c0_5 = arith.constant 0 : index
    %c0_6 = arith.constant 0 : index
    %8 = vector.load %arg4[%c0_5, %c0_6] : memref<1136x48xf32, #tpu.memory_space<vmem>>, vector<384x48xf32>
    %cst_7 = arith.constant dense<0.000000e+00> : vector<2x48xf32>
    %9 = tpu.matmul %7, %8, %cst_7 {dimension_numbers = #tpu.dot_dimension_numbers<[1], [0], [0], [1], [0, 0, 1, 1], [], []>} : vector<2x384xf32>, vector<384x48xf32>, vector<2x48xf32> -> vector<2x48xf32>
    %c384 = arith.constant 384 : index
    %c0_8 = arith.constant 0 : index
    %10 = vector.load %arg4[%c384, %c0_8] : memref<1136x48xf32, #tpu.memory_space<vmem>>, vector<1x48xf32>
    %11 = vector.broadcast %10 : vector<1x48xf32> to vector<2x48xf32>
    %12 = arith.addf %9, %11 : vector<2x48xf32>
    %cst_9 = arith.constant 0.000000e+00 : f32
    %13 = vector.broadcast %cst_9 : f32 to vector<2x48xf32>
    %14 = arith.maximumf %12, %13 : vector<2x48xf32>
    %c392 = arith.constant 392 : index
    %c0_10 = arith.constant 0 : index
    %15 = vector.load %arg4[%c392, %c0_10] : memref<1136x48xf32, #tpu.memory_space<vmem>>, vector<48x24xf32>
    %cst_11 = arith.constant dense<0.000000e+00> : vector<2x24xf32>
    %16 = tpu.matmul %14, %15, %cst_11 {dimension_numbers = #tpu.dot_dimension_numbers<[1], [0], [0], [1], [0, 0, 1, 1], [], []>} : vector<2x48xf32>, vector<48x24xf32>, vector<2x24xf32> -> vector<2x24xf32>
    %c0_12 = arith.constant 0 : index
    %c0_13 = arith.constant 0 : index
    %17 = vector.load %arg1[%c0_12, %c0_13] : memref<2x42xf32, #tpu.memory_space<vmem>>, vector<2x42xf32>
    %c40 = arith.constant 40 : index
    %c0_14 = arith.constant 0 : index
    %18 = vector.load %arg3[%c40, %c0_14] : memref<224x384xf32, #tpu.memory_space<vmem>>, vector<42x384xf32>
    %cst_15 = arith.constant dense<0.000000e+00> : vector<2x384xf32>
    %19 = tpu.matmul %17, %18, %cst_15 {dimension_numbers = #tpu.dot_dimension_numbers<[1], [0], [0], [1], [0, 0, 1, 1], [], []>} : vector<2x42xf32>, vector<42x384xf32>, vector<2x384xf32> -> vector<2x384xf32>
    %c88 = arith.constant 88 : index
    %c0_16 = arith.constant 0 : index
    %20 = vector.load %arg3[%c88, %c0_16] : memref<224x384xf32, #tpu.memory_space<vmem>>, vector<1x384xf32>
    %21 = vector.broadcast %20 : vector<1x384xf32> to vector<2x384xf32>
    %22 = arith.addf %19, %21 : vector<2x384xf32>
    %c96 = arith.constant 96 : index
    %c0_17 = arith.constant 0 : index
    %23 = vector.load %arg3[%c96, %c0_17] : memref<224x384xf32, #tpu.memory_space<vmem>>, vector<48x384xf32>
    %cst_18 = arith.constant dense<0.000000e+00> : vector<2x384xf32>
    %24 = tpu.matmul %14, %23, %cst_18 {dimension_numbers = #tpu.dot_dimension_numbers<[1], [0], [0], [1], [0, 0, 1, 1], [], []>} : vector<2x48xf32>, vector<48x384xf32>, vector<2x384xf32> -> vector<2x384xf32>
    %25 = arith.addf %22, %24 : vector<2x384xf32>
    %cst_19 = arith.constant 0.000000e+00 : f32
    %26 = vector.broadcast %cst_19 : f32 to vector<2x384xf32>
    %27 = arith.maximumf %25, %26 : vector<2x384xf32>
    %c440 = arith.constant 440 : index
    %c0_20 = arith.constant 0 : index
    %28 = vector.load %arg4[%c440, %c0_20] : memref<1136x48xf32, #tpu.memory_space<vmem>>, vector<384x48xf32>
    %cst_21 = arith.constant dense<0.000000e+00> : vector<2x48xf32>
    %29 = tpu.matmul %27, %28, %cst_21 {dimension_numbers = #tpu.dot_dimension_numbers<[1], [0], [0], [1], [0, 0, 1, 1], [], []>} : vector<2x384xf32>, vector<384x48xf32>, vector<2x48xf32> -> vector<2x48xf32>
    %c824 = arith.constant 824 : index
    %c0_22 = arith.constant 0 : index
    %30 = vector.load %arg4[%c824, %c0_22] : memref<1136x48xf32, #tpu.memory_space<vmem>>, vector<1x48xf32>
    %31 = vector.broadcast %30 : vector<1x48xf32> to vector<2x48xf32>
    %32 = arith.addf %29, %31 : vector<2x48xf32>
    %cst_23 = arith.constant 0.000000e+00 : f32
    %33 = vector.broadcast %cst_23 : f32 to vector<2x48xf32>
    %34 = arith.maximumf %32, %33 : vector<2x48xf32>
    %c832 = arith.constant 832 : index
    %c0_24 = arith.constant 0 : index
    %35 = vector.load %arg4[%c832, %c0_24] : memref<1136x48xf32, #tpu.memory_space<vmem>>, vector<48x24xf32>
    %cst_25 = arith.constant dense<0.000000e+00> : vector<2x24xf32>
    %36 = tpu.matmul %34, %35, %cst_25 {dimension_numbers = #tpu.dot_dimension_numbers<[1], [0], [0], [1], [0, 0, 1, 1], [], []>} : vector<2x48xf32>, vector<48x24xf32>, vector<2x24xf32> -> vector<2x24xf32>
    %37 = arith.addf %16, %36 : vector<2x24xf32>
    %c0_26 = arith.constant 0 : index
    %c0_27 = arith.constant 0 : index
    %38 = vector.load %arg2[%c0_26, %c0_27] : memref<2x21xf32, #tpu.memory_space<vmem>>, vector<2x21xf32>
    %c144 = arith.constant 144 : index
    %c0_28 = arith.constant 0 : index
    %39 = vector.load %arg3[%c144, %c0_28] : memref<224x384xf32, #tpu.memory_space<vmem>>, vector<21x192xf32>
    %cst_29 = arith.constant dense<0.000000e+00> : vector<2x192xf32>
    %40 = tpu.matmul %38, %39, %cst_29 {dimension_numbers = #tpu.dot_dimension_numbers<[1], [0], [0], [1], [0, 0, 1, 1], [], []>} : vector<2x21xf32>, vector<21x192xf32>, vector<2x192xf32> -> vector<2x192xf32>
    %c168 = arith.constant 168 : index
    %c0_30 = arith.constant 0 : index
    %41 = vector.load %arg3[%c168, %c0_30] : memref<224x384xf32, #tpu.memory_space<vmem>>, vector<1x192xf32>
    %42 = vector.broadcast %41 : vector<1x192xf32> to vector<2x192xf32>
    %43 = arith.addf %40, %42 : vector<2x192xf32>
    %c176 = arith.constant 176 : index
    %c0_31 = arith.constant 0 : index
    %44 = vector.load %arg3[%c176, %c0_31] : memref<224x384xf32, #tpu.memory_space<vmem>>, vector<48x192xf32>
    %cst_32 = arith.constant dense<0.000000e+00> : vector<2x192xf32>
    %45 = tpu.matmul %34, %44, %cst_32 {dimension_numbers = #tpu.dot_dimension_numbers<[1], [0], [0], [1], [0, 0, 1, 1], [], []>} : vector<2x48xf32>, vector<48x192xf32>, vector<2x192xf32> -> vector<2x192xf32>
    %46 = arith.addf %43, %45 : vector<2x192xf32>
    %cst_33 = arith.constant 0.000000e+00 : f32
    %47 = vector.broadcast %cst_33 : f32 to vector<2x192xf32>
    %48 = arith.maximumf %46, %47 : vector<2x192xf32>
    %c880 = arith.constant 880 : index
    %c0_34 = arith.constant 0 : index
    %49 = vector.load %arg4[%c880, %c0_34] : memref<1136x48xf32, #tpu.memory_space<vmem>>, vector<192x24xf32>
    %cst_35 = arith.constant dense<0.000000e+00> : vector<2x24xf32>
    %50 = tpu.matmul %48, %49, %cst_35 {dimension_numbers = #tpu.dot_dimension_numbers<[1], [0], [0], [1], [0, 0, 1, 1], [], []>} : vector<2x192xf32>, vector<192x24xf32>, vector<2x24xf32> -> vector<2x24xf32>
    %c1072 = arith.constant 1072 : index
    %c0_36 = arith.constant 0 : index
    %51 = vector.load %arg4[%c1072, %c0_36] : memref<1136x48xf32, #tpu.memory_space<vmem>>, vector<1x24xf32>
    %52 = vector.broadcast %51 : vector<1x24xf32> to vector<2x24xf32>
    %53 = arith.addf %50, %52 : vector<2x24xf32>
    %cst_37 = arith.constant 0.000000e+00 : f32
    %54 = vector.broadcast %cst_37 : f32 to vector<2x24xf32>
    %55 = arith.maximumf %53, %54 : vector<2x24xf32>
    %c1080 = arith.constant 1080 : index
    %c0_38 = arith.constant 0 : index
    %56 = vector.load %arg4[%c1080, %c0_38] : memref<1136x48xf32, #tpu.memory_space<vmem>>, vector<24x24xf32>
    %cst_39 = arith.constant dense<0.000000e+00> : vector<2x24xf32>
    %57 = tpu.matmul %55, %56, %cst_39 {dimension_numbers = #tpu.dot_dimension_numbers<[1], [0], [0], [1], [0, 0, 1, 1], [], []>} : vector<2x24xf32>, vector<24x24xf32>, vector<2x24xf32> -> vector<2x24xf32>
    %58 = arith.addf %37, %57 : vector<2x24xf32>
    %c1104 = arith.constant 1104 : index
    %c0_40 = arith.constant 0 : index
    %59 = vector.load %arg4[%c1104, %c0_40] : memref<1136x48xf32, #tpu.memory_space<vmem>>, vector<24x1xf32>
    %cst_41 = arith.constant dense<0.000000e+00> : vector<2x1xf32>
    %60 = tpu.matmul %58, %59, %cst_41 {dimension_numbers = #tpu.dot_dimension_numbers<[1], [0], [0], [1], [0, 0, 1, 1], [], []>} : vector<2x24xf32>, vector<24x1xf32>, vector<2x1xf32> -> vector<2x1xf32>
    %c1128 = arith.constant 1128 : index
    %c0_42 = arith.constant 0 : index
    %61 = vector.load %arg4[%c1128, %c0_42] : memref<1136x48xf32, #tpu.memory_space<vmem>>, vector<1x1xf32>
    %62 = vector.broadcast %61 : vector<1x1xf32> to vector<2x1xf32>
    %63 = arith.addf %60, %62 : vector<2x1xf32>
    %c0_43 = arith.constant 0 : index
    %c0_44 = arith.constant 0 : index
    %64 = vector.load %arg5[%c0_43, %c0_44] : memref<2x1xf32, #tpu.memory_space<vmem>>, vector<2x1xf32>
    tpu.vector_store %arg5[%c0_43, %c0_44], %63 {strides = array<i32>} : memref<2x1xf32, #tpu.memory_space<vmem>>, vector<2x1xf32>,
    return
  }
}

</mosaic_0001>

<llo_original>
// kernel: _lambda_.1
$region0: #{_lambda_.1}
  #allocation0 [shape = 'u32[]', space=smem, size = 0x4, offset = 0x4, fixed_abs, tag = 'smem constant byte address 0x4 - core index']
  #allocation1 [shape = 'u32[144,128]{1,0:T(1,128)}', space=vmem, size = 0x12000, scoped, tag = 'internal scratch']
  %s0 = inlined_call_operand.vmem [shape: f32[2,30], index: 0, kind: input, shape index: {}]
  %s1 = inlined_call_operand.vmem [shape: f32[2,42], index: 1, kind: input, shape index: {}]
  %s2 = inlined_call_operand.vmem [shape: f32[2,21], index: 2, kind: input, shape index: {}]
  %s3 = inlined_call_operand.vmem [shape: f32[224,384], index: 3, kind: input, shape index: {}]
  %s4 = inlined_call_operand.vmem [shape: f32[1136,48], index: 4, kind: input, shape index: {}]
  %s5 = inlined_call_operand.vmem [shape: f32[2,1], index: 5, kind: output, shape index: {}]
  %s6 = sld [smem:[#allocation0]]
  $region30: #{_lambda_.1} parent=0
    _
  %s8 = ssub.s32 1, %s6
  %s9 = scalar_select 0, %s8, %s6
  // Predicated region
  $region2: #{_lambda_.1} parent=0 // pred_check
    _
  $region3: #{_lambda_.1} parent=0 // pred_check_branch
    %11 = sbr.rel (0) target = $region5
  $region4: #{_lambda_.1} parent=0 // pred_region
    _
  $region5: #{_lambda_.1} parent=0 // pred_fallthru
    _
  // Predicated region
  $region6: #{_lambda_.1} parent=0 // pred_check
    _
  $region7: #{_lambda_.1} parent=0 // pred_check_branch
    %13 = sbr.rel (0) target = $region9
  $region8: #{_lambda_.1} parent=0 // pred_region
    _
  $region9: #{_lambda_.1} parent=0 // pred_fallthru
    _
  // Predicated region
  $region10: #{_lambda_.1} parent=0 // pred_check
    _
  $region11: #{_lambda_.1} parent=0 // pred_check_branch
    %15 = sbr.rel (0) target = $region13
  $region12: #{_lambda_.1} parent=0 // pred_region
    _
  $region13: #{_lambda_.1} parent=0 // pred_fallthru
    _
  // Predicated region
  $region14: #{_lambda_.1} parent=0 // pred_check
    _
  $region15: #{_lambda_.1} parent=0 // pred_check_branch
    %17 = sbr.rel (0) target = $region17
  $region16: #{_lambda_.1} parent=0 // pred_region
    _
  $region17: #{_lambda_.1} parent=0 // pred_fallthru
    _
  // Predicated region
  $region18: #{_lambda_.1} parent=0 // pred_check
    _
  $region19: #{_lambda_.1} parent=0 // pred_check_branch
    %19 = sbr.rel (0) target = $region21
  $region20: #{_lambda_.1} parent=0 // pred_region
    _
  $region21: #{_lambda_.1} parent=0 // pred_fallthru
    _
  %v20 = vld [vmem:[%s0] sm:$0x3]
  %v21 = vld [vmem:[%s3] sm:$0xff]
  %v22 = vld [vmem:[%s3 + $0x8] sm:$0xff]
  %v23 = vld [vmem:[%s3 + $0x10] sm:$0xff]
  %v24 = vld [vmem:[%s3 + $0x18] sm:$0xff]
  %v25 = vld [vmem:[%s3 + $0x20] sm:$0xff]
  %v26 = vld [vmem:[%s3 + $0x28] sm:$0xff]
  %v27 = vld [vmem:[%s3 + $0x30] sm:$0xff]
  %v28 = vld [vmem:[%s3 + $0x38] sm:$0xff]
  %v29 = vld [vmem:[%s3 + $0x40] sm:$0xff]
  %v30 = vld [vmem:[%s3 + $0x48] sm:$0x3f]
  %v31 = vld [vmem:[%s3 + $0x50] sm:$0x3f]
  %v32 = vld [vmem:[%s3 + $0x58] sm:$0x3f]
  %s33 = scalar_lea.vmem %s3, 96
  %v34 = vld [vmem:[%s33] ss:$8 sm:$0x7]
  %v36 = vlaneseq
  %v37 = vshrl.u32 %v36, 7
  %v38 = vsub.s32 0, %v37
  %v39 = vrot.slane %v34, %v38
  %v40 = vlaneseq
  %v41 = vshrl.u32 %v40, 7
  %v42 = vsub.s32 1, %v41
  %v43 = vrot.slane %v34, %v42
  %v44 = vlaneseq
  %v45 = vshrl.u32 %v44, 7
  %v46 = vsub.s32 2, %v45
  %v47 = vrot.slane %v34, %v46
  %vm51 = vcmask 244736
  %v53 = vsel %vm51, %v20, 0
  %vm55 = vcmask 1045504
  %v57 = vsel %vm55, %v30, 0
  %v60 = vsel %vm55, %v31, 0
  %v63 = vsel %vm55, %v32, 0
  %65 = vmatprep.subr.mxu0 0.0
  %66 = vmatpush1.msra.mxu0 0.0
  %67 = vmatprep.subr.mxu0 0.0
  %68 = vmatpush1.msra.mxu0 0.0
  %69 = vmatprep.subr.mxu0 0.0
  %70 = vmatpush1.msra.mxu0 0.0
  %71 = vmatprep.subr.mxu0 0.0
  %72 = vmatpush1.msra.mxu0 0.0
  %73 = vmatprep.subr.mxu0 0.0
  %74 = vmatpush1.msra.mxu0 0.0
  %75 = vmatprep.subr.mxu0 0.0
  %76 = vmatpush1.msra.mxu0 0.0
  %77 = vmatprep.subr.mxu0 0.0
  %78 = vmatpush1.msra.mxu0 0.0
  %79 = vmatprep.subr.mxu0 0.0
  %80 = vmatpush1.msra.mxu0 0.0
  %81 = vmatprep.subr.mxu0 0.0
  %82 = vmatpush1.msra.mxu0 0.0
  %83 = vmatprep.subr.mxu0 0.0
  %84 = vmatpush1.msra.mxu0 0.0
  %85 = vmatprep.subr.mxu0 0.0
  %86 = vmatpush1.msra.mxu0 0.0
  %87 = vmatprep.subr.mxu0 0.0
  %88 = vmatpush1.msra.mxu0 0.0
  %89 = vmatprep.subr.mxu0 %v60
  %90 = vmatpush1.msra.mxu0 %v57
  %91 = vmatprep.subr.mxu0 %v28
  %92 = vmatpush1.msra.mxu0 %v27
  %93 = vmatprep.subr.mxu0 %v25
  %94 = vmatpush1.msra.mxu0 %v24
  %95 = vmatprep.subr.mxu0 %v22
  %96 = vmatpush1.msra.mxu0 %v21
  %97 = vmatprep.subr.mxu0 0.0
  %98 = vmatpush2.msra.mxu0 0.0
  %99 = vmatprep.subr.mxu0 0.0
  %100 = vmatpush2.msra.mxu0 0.0
  %101 = vmatprep.subr.mxu0 0.0
  %102 = vmatpush2.msra.mxu0 0.0
  %103 = vmatprep.subr.mxu0 0.0
  %104 = vmatpush2.msra.mxu0 0.0
  %105 = vmatprep.subr.mxu0 0.0
  %106 = vmatpush2.msra.mxu0 0.0
  %107 = vmatprep.subr.mxu0 0.0
  %108 = vmatpush2.msra.mxu0 0.0
  %109 = vmatprep.subr.mxu0 0.0
  %110 = vmatpush2.msra.mxu0 0.0
  %111 = vmatprep.subr.mxu0 0.0
  %112 = vmatpush2.msra.mxu0 0.0
  %113 = vmatprep.subr.mxu0 0.0
  %114 = vmatpush2.msra.mxu0 0.0
  %115 = vmatprep.subr.mxu0 0.0
  %116 = vmatpush2.msra.mxu0 0.0
  %117 = vmatprep.subr.mxu0 0.0
  %118 = vmatpush2.msra.mxu0 0.0
  %119 = vmatprep.subr.mxu0 0.0
  %120 = vmatpush2.msra.mxu0 0.0
  %121 = vmatprep.subr.mxu0 0.0
  %122 = vmatpush2.msra.mxu0 0.0
  %123 = vmatprep.subr.mxu0 0.0
  %124 = vmatpush2.msra.mxu0 0.0
  %125 = vmatprep.subr.mxu0 0.0
  %126 = vmatpush2.msra.mxu0 0.0
  %127 = vmatprep.subr.mxu0 0.0
  %128 = vmatpush2.msra.mxu0 0.0
  %129 = vmatprep.mubr.f32.mxu0 0.0
  %130 = vmatmul.mubr.f32.gmra.mxu0 %v53
  %v131 = vpop.f32.mrf.mxu0
  %v132 = vadd.f32 %v39, %v131
  %v133 = vpop.f32.mrf.mxu0
  %v134 = vadd.f32 %v43, %v133
  %135 = vdwg.mxu0
  %136 = vmatprep.subr.mxu0 0.0
  %137 = vmatpush1.msra.mxu0 0.0
  %138 = vmatprep.subr.mxu0 0.0
  %139 = vmatpush1.msra.mxu0 0.0
  %140 = vmatprep.subr.mxu0 0.0
  %141 = vmatpush1.msra.mxu0 0.0
  %142 = vmatprep.subr.mxu0 0.0
  %143 = vmatpush1.msra.mxu0 0.0
  %144 = vmatprep.subr.mxu0 0.0
  %145 = vmatpush1.msra.mxu0 0.0
  %146 = vmatprep.subr.mxu0 0.0
  %147 = vmatpush1.msra.mxu0 0.0
  %148 = vmatprep.subr.mxu0 0.0
  %149 = vmatpush1.msra.mxu0 0.0
  %150 = vmatprep.subr.mxu0 0.0
  %151 = vmatpush1.msra.mxu0 0.0
  %152 = vmatprep.subr.mxu0 0.0
  %153 = vmatpush1.msra.mxu0 0.0
  %154 = vmatprep.subr.mxu0 0.0
  %155 = vmatpush1.msra.mxu0 0.0
  %156 = vmatprep.subr.mxu0 0.0
  %157 = vmatpush1.msra.mxu0 0.0
  %158 = vmatprep.subr.mxu0 0.0
  %159 = vmatpush1.msra.mxu0 0.0
  %160 = vmatprep.subr.mxu0 0.0
  %161 = vmatpush1.msra.mxu0 %v63
  %162 = vmatprep.subr.mxu0 0.0
  %163 = vmatpush1.msra.mxu0 %v29
  %164 = vmatprep.subr.mxu0 0.0
  %165 = vmatpush1.msra.mxu0 %v26
  %166 = vmatprep.subr.mxu0 0.0
  %167 = vmatpush1.msra.mxu0 %v23
  %168 = vmatprep.subr.mxu0 0.0
  %169 = vmatpush2.msra.mxu0 0.0
  %170 = vmatprep.subr.mxu0 0.0
  %171 = vmatpush2.msra.mxu0 0.0
  %172 = vmatprep.subr.mxu0 0.0
  %173 = vmatpush2.msra.mxu0 0.0
  %174 = vmatprep.subr.mxu0 0.0
  %175 = vmatpush2.msra.mxu0 0.0
  %176 = vmatprep.subr.mxu0 0.0
  %177 = vmatpush2.msra.mxu0 0.0
  %178 = vmatprep.subr.mxu0 0.0
  %179 = vmatpush2.msra.mxu0 0.0
  %180 = vmatprep.subr.mxu0 0.0
  %181 = vmatpush2.msra.mxu0 0.0
  %182 = vmatprep.subr.mxu0 0.0
  %183 = vmatpush2.msra.mxu0 0.0
  %184 = vmatprep.subr.mxu0 0.0
  %185 = vmatpush2.msra.mxu0 0.0
  %186 = vmatprep.subr.mxu0 0.0
  %187 = vmatpush2.msra.mxu0 0.0
  %188 = vmatprep.subr.mxu0 0.0
  %189 = vmatpush2.msra.mxu0 0.0
  %190 = vmatprep.subr.mxu0 0.0
  %191 = vmatpush2.msra.mxu0 0.0
  %192 = vmatprep.subr.mxu0 0.0
  %193 = vmatpush2.msra.mxu0 0.0
  %194 = vmatprep.subr.mxu0 0.0
  %195 = vmatpush2.msra.mxu0 0.0
  %196 = vmatprep.subr.mxu0 0.0
  %197 = vmatpush2.msra.mxu0 0.0
  %198 = vmatprep.subr.mxu0 0.0
  %199 = vmatpush2.msra.mxu0 0.0
  %200 = vmatprep.mubr.f32.mxu0 0.0
  %201 = vmatmul.mubr.f32.gmra.mxu0 %v53
  %v202 = vpop.f32.mrf.mxu0
  %v203 = vadd.f32 %v47, %v202
  %v204 = vpop.f32.mrf.mxu0
  %205 = vdwg.mxu0
  %v206 = vmax.f32 %v132, 0.0
  %v207 = vmax.f32 %v134, 0.0
  %v208 = vmax.f32 %v203, 0.0
  %v209 = vld [vmem:[%s4] sm:$0xff]
  %v210 = vld [vmem:[%s4 + $0x8] sm:$0xff]
  %v211 = vld [vmem:[%s4 + $0x10] sm:$0xff]
  %v212 = vld [vmem:[%s4 + $0x18] sm:$0xff]
  %v213 = vld [vmem:[%s4 + $0x20] sm:$0xff]
  %v214 = vld [vmem:[%s4 + $0x28] sm:$0xff]
  %v215 = vld [vmem:[%s4 + $0x30] sm:$0xff]
  %v216 = vld [vmem:[%s4 + $0x38] sm:$0xff]
  %v217 = vld [vmem:[%s4 + $0x40] sm:$0xff]
  %v218 = vld [vmem:[%s4 + $0x48] sm:$0xff]
  %v219 = vld [vmem:[%s4 + $0x50] sm:$0xff]
  %v220 = vld [vmem:[%s4 + $0x58] sm:$0xff]
  %v221 = vld [vmem:[%s4 + $0x60] sm:$0xff]
  %v222 = vld [vmem:[%s4 + $0x68] sm:$0xff]
  %v223 = vld [vmem:[%s4 + $0x70] sm:$0xff]
  %v224 = vld [vmem:[%s4 + $0x78] sm:$0xff]
  %v225 = vld [vmem:[%s4 + $0x80] sm:$0xff]
  %v226 = vld [vmem:[%s4 + $0x88] sm:$0xff]
  %v227 = vld [vmem:[%s4 + $0x90] sm:$0xff]
  %v228 = vld [vmem:[%s4 + $0x98] sm:$0xff]
  %v229 = vld [vmem:[%s4 + $0xa0] sm:$0xff]
  %v230 = vld [vmem:[%s4 + $0xa8] sm:$0xff]
  %v231 = vld [vmem:[%s4 + $0xb0] sm:$0xff]
  %v232 = vld [vmem:[%s4 + $0xb8] sm:$0xff]
  %v233 = vld [vmem:[%s4 + $0xc0] sm:$0xff]
  %v234 = vld [vmem:[%s4 + $0xc8] sm:$0xff]
  %v235 = vld [vmem:[%s4 + $0xd0] sm:$0xff]
  %v236 = vld [vmem:[%s4 + $0xd8] sm:$0xff]
  %v237 = vld [vmem:[%s4 + $0xe0] sm:$0xff]
  %v238 = vld [vmem:[%s4 + $0xe8] sm:$0xff]
  %v239 = vld [vmem:[%s4 + $0xf0] sm:$0xff]
  %v240 = vld [vmem:[%s4 + $0xf8] sm:$0xff]
  %v241 = vld [vmem:[%s4 + $0x100] sm:$0xff]
  %v242 = vld [vmem:[%s4 + $0x108] sm:$0xff]
  %v243 = vld [vmem:[%s4 + $0x110] sm:$0xff]
  %v244 = vld [vmem:[%s4 + $0x118] sm:$0xff]
  %v245 = vld [vmem:[%s4 + $0x120] sm:$0xff]
  %v246 = vld [vmem:[%s4 + $0x128] sm:$0xff]
  %v247 = vld [vmem:[%s4 + $0x130] sm:$0xff]
  %v248 = vld [vmem:[%s4 + $0x138] sm:$0xff]
  %v249 = vld [vmem:[%s4 + $0x140] sm:$0xff]
  %v250 = vld [vmem:[%s4 + $0x148] sm:$0xff]
  %v251 = vld [vmem:[%s4 + $0x150] sm:$0xff]
  %v252 = vld [vmem:[%s4 + $0x158] sm:$0xff]
  %v253 = vld [vmem:[%s4 + $0x160] sm:$0xff]
  %v254 = vld [vmem:[%s4 + $0x168] sm:$0xff]
  %v255 = vld [vmem:[%s4 + $0x170] sm:$0xff]
  %v256 = vld [vmem:[%s4 + $0x178] sm:$0xff]
  %v257 = vld [vmem:[%s4 + $0x180] sm:$0x1]
  %v258 = vlaneseq
  %v259 = vshrl.u32 %v258, 7
  %v260 = vsub.s32 0, %v259
  %v261 = vrot.slane %v257, %v260
  %262 = vmatprep.subr.mxu0 0.0
  %263 = vmatpush1.msra.mxu0 %v224
  %264 = vmatprep.subr.mxu0 0.0
  %265 = vmatpush1.msra.mxu0 %v223
  %266 = vmatprep.subr.mxu0 0.0
  %267 = vmatpush1.msra.mxu0 %v222
  %268 = vmatprep.subr.mxu0 0.0
  %269 = vmatpush1.msra.mxu0 %v221
  %270 = vmatprep.subr.mxu0 0.0
  %271 = vmatpush1.msra.mxu0 %v220
  %272 = vmatprep.subr.mxu0 0.0
  %273 = vmatpush1.msra.mxu0 %v219
  %274 = vmatprep.subr.mxu0 0.0
  %275 = vmatpush1.msra.mxu0 %v218
  %276 = vmatprep.subr.mxu0 0.0
  %277 = vmatpush1.msra.mxu0 %v217
  %278 = vmatprep.subr.mxu0 0.0
  %279 = vmatpush1.msra.mxu0 %v216
  %280 = vmatprep.subr.mxu0 0.0
  %281 = vmatpush1.msra.mxu0 %v215
  %282 = vmatprep.subr.mxu0 0.0
  %283 = vmatpush1.msra.mxu0 %v214
  %284 = vmatprep.subr.mxu0 0.0
  %285 = vmatpush1.msra.mxu0 %v213
  %286 = vmatprep.subr.mxu0 0.0
  %287 = vmatpush1.msra.mxu0 %v212
  %288 = vmatprep.subr.mxu0 0.0
  %289 = vmatpush1.msra.mxu0 %v211
  %290 = vmatprep.subr.mxu0 0.0
  %291 = vmatpush1.msra.mxu0 %v210
  %292 = vmatprep.subr.mxu0 0.0
  %293 = vmatpush1.msra.mxu0 %v209
  %294 = vmatprep.subr.mxu0 0.0
  %295 = vmatpush2.msra.mxu0 %v240
  %296 = vmatprep.subr.mxu0 0.0
  %297 = vmatpush2.msra.mxu0 %v239
  %298 = vmatprep.subr.mxu0 0.0
  %299 = vmatpush2.msra.mxu0 %v238
  %300 = vmatprep.subr.mxu0 0.0
  %301 = vmatpush2.msra.mxu0 %v237
  %302 = vmatprep.subr.mxu0 0.0
  %303 = vmatpush2.msra.mxu0 %v236
  %304 = vmatprep.subr.mxu0 0.0
  %305 = vmatpush2.msra.mxu0 %v235
  %306 = vmatprep.subr.mxu0 0.0
  %307 = vmatpush2.msra.mxu0 %v234
  %308 = vmatprep.subr.mxu0 0.0
  %309 = vmatpush2.msra.mxu0 %v233
  %310 = vmatprep.subr.mxu0 0.0
  %311 = vmatpush2.msra.mxu0 %v232
  %312 = vmatprep.subr.mxu0 0.0
  %313 = vmatpush2.msra.mxu0 %v231
  %314 = vmatprep.subr.mxu0 0.0
  %315 = vmatpush2.msra.mxu0 %v230
  %316 = vmatprep.subr.mxu0 0.0
  %317 = vmatpush2.msra.mxu0 %v229
  %318 = vmatprep.subr.mxu0 0.0
  %319 = vmatpush2.msra.mxu0 %v228
  %320 = vmatprep.subr.mxu0 0.0
  %321 = vmatpush2.msra.mxu0 %v227
  %322 = vmatprep.subr.mxu0 0.0
  %323 = vmatpush2.msra.mxu0 %v226
  %324 = vmatprep.subr.mxu0 0.0
  %325 = vmatpush2.msra.mxu0 %v225
  %326 = vmatprep.mubr.f32.mxu0 %v207
  %327 = vmatmul.mubr.f32.gmra.mxu0 %v206
  %v328 = vpop.f32.mrf.mxu0
  %v329 = vadd.f32 %v261, %v328
  %v330 = vpop.f32.mrf.mxu0
  %331 = vdwg.mxu0
  %332 = vmatprep.subr.mxu0 0.0
  %333 = vmatpush1.msra.mxu0 %v256
  %334 = vmatprep.subr.mxu0 0.0
  %335 = vmatpush1.msra.mxu0 %v255
  %336 = vmatprep.subr.mxu0 0.0
  %337 = vmatpush1.msra.mxu0 %v254
  %338 = vmatprep.subr.mxu0 0.0
  %339 = vmatpush1.msra.mxu0 %v253
  %340 = vmatprep.subr.mxu0 0.0
  %341 = vmatpush1.msra.mxu0 %v252
  %342 = vmatprep.subr.mxu0 0.0
  %343 = vmatpush1.msra.mxu0 %v251
  %344 = vmatprep.subr.mxu0 0.0
  %345 = vmatpush1.msra.mxu0 %v250
  %346 = vmatprep.subr.mxu0 0.0
  %347 = vmatpush1.msra.mxu0 %v249
  %348 = vmatprep.subr.mxu0 0.0
  %349 = vmatpush1.msra.mxu0 %v248
  %350 = vmatprep.subr.mxu0 0.0
  %351 = vmatpush1.msra.mxu0 %v247
  %352 = vmatprep.subr.mxu0 0.0
  %353 = vmatpush1.msra.mxu0 %v246
  %354 = vmatprep.subr.mxu0 0.0
  %355 = vmatpush1.msra.mxu0 %v245
  %356 = vmatprep.subr.mxu0 0.0
  %357 = vmatpush1.msra.mxu0 %v244
  %358 = vmatprep.subr.mxu0 0.0
  %359 = vmatpush1.msra.mxu0 %v243
  %360 = vmatprep.subr.mxu0 0.0
  %361 = vmatpush1.msra.mxu0 %v242
  %362 = vmatprep.subr.mxu0 0.0
  %363 = vmatpush1.msra.mxu0 %v241
  %364 = vmatprep.subr.mxu0 0.0
  %365 = vmatpush2.msra.mxu0 0.0
  %366 = vmatprep.subr.mxu0 0.0
  %367 = vmatpush2.msra.mxu0 0.0
  %368 = vmatprep.subr.mxu0 0.0
  %369 = vmatpush2.msra.mxu0 0.0
  %370 = vmatprep.subr.mxu0 0.0
  %371 = vmatpush2.msra.mxu0 0.0
  %372 = vmatprep.subr.mxu0 0.0
  %373 = vmatpush2.msra.mxu0 0.0
  %374 = vmatprep.subr.mxu0 0.0
  %375 = vmatpush2.msra.mxu0 0.0
  %376 = vmatprep.subr.mxu0 0.0
  %377 = vmatpush2.msra.mxu0 0.0
  %378 = vmatprep.subr.mxu0 0.0
  %379 = vmatpush2.msra.mxu0 0.0
  %380 = vmatprep.subr.mxu0 0.0
  %381 = vmatpush2.msra.mxu0 0.0
  %382 = vmatprep.subr.mxu0 0.0
  %383 = vmatpush2.msra.mxu0 0.0
  %384 = vmatprep.subr.mxu0 0.0
  %385 = vmatpush2.msra.mxu0 0.0
  %386 = vmatprep.subr.mxu0 0.0
  %387 = vmatpush2.msra.mxu0 0.0
  %388 = vmatprep.subr.mxu0 0.0
  %389 = vmatpush2.msra.mxu0 0.0
  %390 = vmatprep.subr.mxu0 0.0
  %391 = vmatpush2.msra.mxu0 0.0
  %392 = vmatprep.subr.mxu0 0.0
  %393 = vmatpush2.msra.mxu0 0.0
  %394 = vmatprep.subr.mxu0 0.0
  %395 = vmatpush2.msra.mxu0 0.0
  %396 = vmatprep.mubr.f32.mxu0 0.0
  %397 = vmatmul.mubr.f32.gmra.mxu0 %v208
  %v398 = vpop.f32.mrf.mxu0
  %v399 = vadd.f32 %v329, %v398
  %v400 = vpop.f32.mrf.mxu0
  %401 = vdwg.mxu0
  %v402 = vmax.f32 %v399, 0.0
  %v403 = vld [vmem:[%s4 + $0x188] sm:$0xff]
  %v404 = vld [vmem:[%s4 + $0x190] sm:$0xff]
  %v405 = vld [vmem:[%s4 + $0x198] sm:$0xff]
  %v406 = vld [vmem:[%s4 + $0x1a0] sm:$0xff]
  %v407 = vld [vmem:[%s4 + $0x1a8] sm:$0xff]
  %v408 = vld [vmem:[%s4 + $0x1b0] sm:$0xff]
  %v409 = vld [vmem:[%s1] sm:$0x3]
  %v410 = vld [vmem:[%s3 + $0x78] sm:$0xff]
  %v411 = vld [vmem:[%s3 + $0x80] sm:$0xff]
  %v412 = vld [vmem:[%s3 + $0x88] sm:$0xff]
  %v413 = vld [vmem:[%s3 + $0x90] sm:$0xff]
  %v414 = vld [vmem:[%s3 + $0x98] sm:$0xff]
  %v415 = vld [vmem:[%s3 + $0xa0] sm:$0xff]
  %v416 = vld [vmem:[%s3 + $0xa8] sm:$0xff]
  %v417 = vld [vmem:[%s3 + $0xb0] sm:$0xff]
  %v418 = vld [vmem:[%s3 + $0xb8] sm:$0xff]
  %v419 = vld [vmem:[%s3 + $0xc0] sm:$0xff]
  %v420 = vld [vmem:[%s3 + $0xc8] sm:$0xff]
  %v421 = vld [vmem:[%s3 + $0xd0] sm:$0xff]
  %v422 = vld [vmem:[%s3 + $0xd8] sm:$0xff]
  %v423 = vld [vmem:[%s3 + $0xe0] sm:$0xff]
  %v424 = vld [vmem:[%s3 + $0xe8] sm:$0xff]
  %v425 = vld [vmem:[%s3 + $0xf0] sm:$0x3]
  %v426 = vld [vmem:[%s3 + $0xf8] sm:$0x3]
  %v427 = vld [vmem:[%s3 + $0x100] sm:$0x3]
  %s428 = scalar_lea.vmem %s3, 264
  %v429 = vld [vmem:[%s428] ss:$8 sm:$0x7]
  %v431 = vlaneseq
  %v432 = vshrl.u32 %v431, 7
  %v433 = vsub.s32 0, %v432
  %v434 = vrot.slane %v429, %v433
  %v435 = vlaneseq
  %v436 = vshrl.u32 %v435, 7
  %v437 = vsub.s32 1, %v436
  %v438 = vrot.slane %v429, %v437
  %v439 = vlaneseq
  %v440 = vshrl.u32 %v439, 7
  %v441 = vsub.s32 2, %v440
  %v442 = vrot.slane %v429, %v441
  %vm446 = vcmask 343040
  %v448 = vsel %vm446, %v409, 0
  %vm450 = vcmask 1041408
  %v452 = vsel %vm450, %v425, 0
  %v455 = vsel %vm450, %v426, 0
  %v458 = vsel %vm450, %v427, 0
  %460 = vmatprep.subr.mxu0 0.0
  %461 = vmatpush1.msra.mxu0 0.0
  %462 = vmatprep.subr.mxu0 0.0
  %463 = vmatpush1.msra.mxu0 0.0
  %464 = vmatprep.subr.mxu0 0.0
  %465 = vmatpush1.msra.mxu0 0.0
  %466 = vmatprep.subr.mxu0 0.0
  %467 = vmatpush1.msra.mxu0 0.0
  %468 = vmatprep.subr.mxu0 0.0
  %469 = vmatpush1.msra.mxu0 0.0
  %470 = vmatprep.subr.mxu0 0.0
  %471 = vmatpush1.msra.mxu0 0.0
  %472 = vmatprep.subr.mxu0 0.0
  %473 = vmatpush1.msra.mxu0 0.0
  %474 = vmatprep.subr.mxu0 0.0
  %475 = vmatpush1.msra.mxu0 0.0
  %476 = vmatprep.subr.mxu0 0.0
  %477 = vmatpush1.msra.mxu0 0.0
  %478 = vmatprep.subr.mxu0 0.0
  %479 = vmatpush1.msra.mxu0 0.0
  %480 = vmatprep.subr.mxu0 %v455
  %481 = vmatpush1.msra.mxu0 %v452
  %482 = vmatprep.subr.mxu0 %v423
  %483 = vmatpush1.msra.mxu0 %v422
  %484 = vmatprep.subr.mxu0 %v420
  %485 = vmatpush1.msra.mxu0 %v419
  %486 = vmatprep.subr.mxu0 %v417
  %487 = vmatpush1.msra.mxu0 %v416
  %488 = vmatprep.subr.mxu0 %v414
  %489 = vmatpush1.msra.mxu0 %v413
  %490 = vmatprep.subr.mxu0 %v411
  %491 = vmatpush1.msra.mxu0 %v410
  %492 = vmatprep.subr.mxu0 0.0
  %493 = vmatpush2.msra.mxu0 0.0
  %494 = vmatprep.subr.mxu0 0.0
  %495 = vmatpush2.msra.mxu0 0.0
  %496 = vmatprep.subr.mxu0 0.0
  %497 = vmatpush2.msra.mxu0 0.0
  %498 = vmatprep.subr.mxu0 0.0
  %499 = vmatpush2.msra.mxu0 0.0
  %500 = vmatprep.subr.mxu0 0.0
  %501 = vmatpush2.msra.mxu0 0.0
  %502 = vmatprep.subr.mxu0 0.0
  %503 = vmatpush2.msra.mxu0 0.0
  %504 = vmatprep.subr.mxu0 0.0
  %505 = vmatpush2.msra.mxu0 0.0
  %506 = vmatprep.subr.mxu0 0.0
  %507 = vmatpush2.msra.mxu0 0.0
  %508 = vmatprep.subr.mxu0 0.0
  %509 = vmatpush2.msra.mxu0 0.0
  %510 = vmatprep.subr.mxu0 0.0
  %511 = vmatpush2.msra.mxu0 0.0
  %512 = vmatprep.subr.mxu0 0.0
  %513 = vmatpush2.msra.mxu0 0.0
  %514 = vmatprep.subr.mxu0 0.0
  %515 = vmatpush2.msra.mxu0 0.0
  %516 = vmatprep.subr.mxu0 0.0
  %517 = vmatpush2.msra.mxu0 0.0
  %518 = vmatprep.subr.mxu0 0.0
  %519 = vmatpush2.msra.mxu0 0.0
  %520 = vmatprep.subr.mxu0 0.0
  %521 = vmatpush2.msra.mxu0 0.0
  %522 = vmatprep.subr.mxu0 0.0
  %523 = vmatpush2.msra.mxu0 0.0
  %524 = vmatprep.mubr.f32.mxu0 0.0
  %525 = vmatmul.mubr.f32.gmra.mxu0 %v448
  %v526 = vpop.f32.mrf.mxu0
  %v527 = vadd.f32 %v434, %v526
  %v528 = vpop.f32.mrf.mxu0
  %v529 = vadd.f32 %v438, %v528
  %530 = vdwg.mxu0
  %531 = vmatprep.subr.mxu0 0.0
  %532 = vmatpush1.msra.mxu0 0.0
  %533 = vmatprep.subr.mxu0 0.0
  %534 = vmatpush1.msra.mxu0 0.0
  %535 = vmatprep.subr.mxu0 0.0
  %536 = vmatpush1.msra.mxu0 0.0
  %537 = vmatprep.subr.mxu0 0.0
  %538 = vmatpush1.msra.mxu0 0.0
  %539 = vmatprep.subr.mxu0 0.0
  %540 = vmatpush1.msra.mxu0 0.0
  %541 = vmatprep.subr.mxu0 0.0
  %542 = vmatpush1.msra.mxu0 0.0
  %543 = vmatprep.subr.mxu0 0.0
  %544 = vmatpush1.msra.mxu0 0.0
  %545 = vmatprep.subr.mxu0 0.0
  %546 = vmatpush1.msra.mxu0 0.0
  %547 = vmatprep.subr.mxu0 0.0
  %548 = vmatpush1.msra.mxu0 0.0
  %549 = vmatprep.subr.mxu0 0.0
  %550 = vmatpush1.msra.mxu0 0.0
  %551 = vmatprep.subr.mxu0 0.0
  %552 = vmatpush1.msra.mxu0 %v458
  %553 = vmatprep.subr.mxu0 0.0
  %554 = vmatpush1.msra.mxu0 %v424
  %555 = vmatprep.subr.mxu0 0.0
  %556 = vmatpush1.msra.mxu0 %v421
  %557 = vmatprep.subr.mxu0 0.0
  %558 = vmatpush1.msra.mxu0 %v418
  %559 = vmatprep.subr.mxu0 0.0
  %560 = vmatpush1.msra.mxu0 %v415
  %561 = vmatprep.subr.mxu0 0.0
  %562 = vmatpush1.msra.mxu0 %v412
  %563 = vmatprep.subr.mxu0 0.0
  %564 = vmatpush2.msra.mxu0 0.0
  %565 = vmatprep.subr.mxu0 0.0
  %566 = vmatpush2.msra.mxu0 0.0
  %567 = vmatprep.subr.mxu0 0.0
  %568 = vmatpush2.msra.mxu0 0.0
  %569 = vmatprep.subr.mxu0 0.0
  %570 = vmatpush2.msra.mxu0 0.0
  %571 = vmatprep.subr.mxu0 0.0
  %572 = vmatpush2.msra.mxu0 0.0
  %573 = vmatprep.subr.mxu0 0.0
  %574 = vmatpush2.msra.mxu0 0.0
  %575 = vmatprep.subr.mxu0 0.0
  %576 = vmatpush2.msra.mxu0 0.0
  %577 = vmatprep.subr.mxu0 0.0
  %578 = vmatpush2.msra.mxu0 0.0
  %579 = vmatprep.subr.mxu0 0.0
  %580 = vmatpush2.msra.mxu0 0.0
  %581 = vmatprep.subr.mxu0 0.0
  %582 = vmatpush2.msra.mxu0 0.0
  %583 = vmatprep.subr.mxu0 0.0
  %584 = vmatpush2.msra.mxu0 0.0
  %585 = vmatprep.subr.mxu0 0.0
  %586 = vmatpush2.msra.mxu0 0.0
  %587 = vmatprep.subr.mxu0 0.0
  %588 = vmatpush2.msra.mxu0 0.0
  %589 = vmatprep.subr.mxu0 0.0
  %590 = vmatpush2.msra.mxu0 0.0
  %591 = vmatprep.subr.mxu0 0.0
  %592 = vmatpush2.msra.mxu0 0.0
  %593 = vmatprep.subr.mxu0 0.0
  %594 = vmatpush2.msra.mxu0 0.0
  %595 = vmatprep.mubr.f32.mxu0 0.0
  %596 = vmatmul.mubr.f32.gmra.mxu0 %v448
  %v597 = vpop.f32.mrf.mxu0
  %v598 = vadd.f32 %v442, %v597
  %v599 = vpop.f32.mrf.mxu0
  %600 = vdwg.mxu0
  %v601 = vld [vmem:[%s3 + $0x120] sm:$0xff]
  %v602 = vld [vmem:[%s3 + $0x128] sm:$0xff]
  %v603 = vld [vmem:[%s3 + $0x130] sm:$0xff]
  %v604 = vld [vmem:[%s3 + $0x138] sm:$0xff]
  %v605 = vld [vmem:[%s3 + $0x140] sm:$0xff]
  %v606 = vld [vmem:[%s3 + $0x148] sm:$0xff]
  %v607 = vld [vmem:[%s3 + $0x150] sm:$0xff]
  %v608 = vld [vmem:[%s3 + $0x158] sm:$0xff]
  %v609 = vld [vmem:[%s3 + $0x160] sm:$0xff]
  %v610 = vld [vmem:[%s3 + $0x168] sm:$0xff]
  %v611 = vld [vmem:[%s3 + $0x170] sm:$0xff]
  %v612 = vld [vmem:[%s3 + $0x178] sm:$0xff]
  %v613 = vld [vmem:[%s3 + $0x180] sm:$0xff]
  %v614 = vld [vmem:[%s3 + $0x188] sm:$0xff]
  %v615 = vld [vmem:[%s3 + $0x190] sm:$0xff]
  %v616 = vld [vmem:[%s3 + $0x198] sm:$0xff]
  %v617 = vld [vmem:[%s3 + $0x1a0] sm:$0xff]
  %v618 = vld [vmem:[%s3 + $0x1a8] sm:$0xff]
  %vm619 = vcmask 392192
  %v621 = vsel %vm619, %v402, 0
  %623 = vmatprep.subr.mxu0 0.0
  %624 = vmatpush1.msra.mxu0 0.0
  %625 = vmatprep.subr.mxu0 0.0
  %626 = vmatpush1.msra.mxu0 0.0
  %627 = vmatprep.subr.mxu0 0.0
  %628 = vmatpush1.msra.mxu0 0.0
  %629 = vmatprep.subr.mxu0 0.0
  %630 = vmatpush1.msra.mxu0 0.0
  %631 = vmatprep.subr.mxu0 0.0
  %632 = vmatpush1.msra.mxu0 0.0
  %633 = vmatprep.subr.mxu0 0.0
  %634 = vmatpush1.msra.mxu0 0.0
  %635 = vmatprep.subr.mxu0 0.0
  %636 = vmatpush1.msra.mxu0 0.0
  %637 = vmatprep.subr.mxu0 0.0
  %638 = vmatpush1.msra.mxu0 0.0
  %639 = vmatprep.subr.mxu0 0.0
  %640 = vmatpush1.msra.mxu0 0.0
  %641 = vmatprep.subr.mxu0 0.0
  %642 = vmatpush1.msra.mxu0 0.0
  %643 = vmatprep.subr.mxu0 %v617
  %644 = vmatpush1.msra.mxu0 %v616
  %645 = vmatprep.subr.mxu0 %v614
  %646 = vmatpush1.msra.mxu0 %v613
  %647 = vmatprep.subr.mxu0 %v611
  %648 = vmatpush1.msra.mxu0 %v610
  %649 = vmatprep.subr.mxu0 %v608
  %650 = vmatpush1.msra.mxu0 %v607
  %651 = vmatprep.subr.mxu0 %v605
  %652 = vmatpush1.msra.mxu0 %v604
  %653 = vmatprep.subr.mxu0 %v602
  %654 = vmatpush1.msra.mxu0 %v601
  %655 = vmatprep.subr.mxu0 0.0
  %656 = vmatpush2.msra.mxu0 0.0
  %657 = vmatprep.subr.mxu0 0.0
  %658 = vmatpush2.msra.mxu0 0.0
  %659 = vmatprep.subr.mxu0 0.0
  %660 = vmatpush2.msra.mxu0 0.0
  %661 = vmatprep.subr.mxu0 0.0
  %662 = vmatpush2.msra.mxu0 0.0
  %663 = vmatprep.subr.mxu0 0.0
  %664 = vmatpush2.msra.mxu0 0.0
  %665 = vmatprep.subr.mxu0 0.0
  %666 = vmatpush2.msra.mxu0 0.0
  %667 = vmatprep.subr.mxu0 0.0
  %668 = vmatpush2.msra.mxu0 0.0
  %669 = vmatprep.subr.mxu0 0.0
  %670 = vmatpush2.msra.mxu0 0.0
  %671 = vmatprep.subr.mxu0 0.0
  %672 = vmatpush2.msra.mxu0 0.0
  %673 = vmatprep.subr.mxu0 0.0
  %674 = vmatpush2.msra.mxu0 0.0
  %675 = vmatprep.subr.mxu0 0.0
  %676 = vmatpush2.msra.mxu0 0.0
  %677 = vmatprep.subr.mxu0 0.0
  %678 = vmatpush2.msra.mxu0 0.0
  %679 = vmatprep.subr.mxu0 0.0
  %680 = vmatpush2.msra.mxu0 0.0
  %681 = vmatprep.subr.mxu0 0.0
  %682 = vmatpush2.msra.mxu0 0.0
  %683 = vmatprep.subr.mxu0 0.0
  %684 = vmatpush2.msra.mxu0 0.0
  %685 = vmatprep.subr.mxu0 0.0
  %686 = vmatpush2.msra.mxu0 0.0
  %687 = vmatprep.mubr.f32.mxu0 0.0
  %688 = vmatmul.mubr.f32.gmra.mxu0 %v621
  %v689 = vpop.f32.mrf.mxu0
  %v690 = vadd.f32 0.0, %v689
  %v691 = vpop.f32.mrf.mxu0
  %v692 = vadd.f32 0.0, %v691
  %693 = vdwg.mxu0
  %694 = vmatprep.subr.mxu0 0.0
  %695 = vmatpush1.msra.mxu0 0.0
  %696 = vmatprep.subr.mxu0 0.0
  %697 = vmatpush1.msra.mxu0 0.0
  %698 = vmatprep.subr.mxu0 0.0
  %699 = vmatpush1.msra.mxu0 0.0
  %700 = vmatprep.subr.mxu0 0.0
  %701 = vmatpush1.msra.mxu0 0.0
  %702 = vmatprep.subr.mxu0 0.0
  %703 = vmatpush1.msra.mxu0 0.0
  %704 = vmatprep.subr.mxu0 0.0
  %705 = vmatpush1.msra.mxu0 0.0
  %706 = vmatprep.subr.mxu0 0.0
  %707 = vmatpush1.msra.mxu0 0.0
  %708 = vmatprep.subr.mxu0 0.0
  %709 = vmatpush1.msra.mxu0 0.0
  %710 = vmatprep.subr.mxu0 0.0
  %711 = vmatpush1.msra.mxu0 0.0
  %712 = vmatprep.subr.mxu0 0.0
  %713 = vmatpush1.msra.mxu0 0.0
  %714 = vmatprep.subr.mxu0 0.0
  %715 = vmatpush1.msra.mxu0 %v618
  %716 = vmatprep.subr.mxu0 0.0
  %717 = vmatpush1.msra.mxu0 %v615
  %718 = vmatprep.subr.mxu0 0.0
  %719 = vmatpush1.msra.mxu0 %v612
  %720 = vmatprep.subr.mxu0 0.0
  %721 = vmatpush1.msra.mxu0 %v609
  %722 = vmatprep.subr.mxu0 0.0
  %723 = vmatpush1.msra.mxu0 %v606
  %724 = vmatprep.subr.mxu0 0.0
  %725 = vmatpush1.msra.mxu0 %v603
  %726 = vmatprep.subr.mxu0 0.0
  %727 = vmatpush2.msra.mxu0 0.0
  %728 = vmatprep.subr.mxu0 0.0
  %729 = vmatpush2.msra.mxu0 0.0
  %730 = vmatprep.subr.mxu0 0.0
  %731 = vmatpush2.msra.mxu0 0.0
  %732 = vmatprep.subr.mxu0 0.0
  %733 = vmatpush2.msra.mxu0 0.0
  %734 = vmatprep.subr.mxu0 0.0
  %735 = vmatpush2.msra.mxu0 0.0
  %736 = vmatprep.subr.mxu0 0.0
  %737 = vmatpush2.msra.mxu0 0.0
  %738 = vmatprep.subr.mxu0 0.0
  %739 = vmatpush2.msra.mxu0 0.0
  %740 = vmatprep.subr.mxu0 0.0
  %741 = vmatpush2.msra.mxu0 0.0
  %742 = vmatprep.subr.mxu0 0.0
  %743 = vmatpush2.msra.mxu0 0.0
  %744 = vmatprep.subr.mxu0 0.0
  %745 = vmatpush2.msra.mxu0 0.0
  %746 = vmatprep.subr.mxu0 0.0
  %747 = vmatpush2.msra.mxu0 0.0
  %748 = vmatprep.subr.mxu0 0.0
  %749 = vmatpush2.msra.mxu0 0.0
  %750 = vmatprep.subr.mxu0 0.0
  %751 = vmatpush2.msra.mxu0 0.0
  %752 = vmatprep.subr.mxu0 0.0
  %753 = vmatpush2.msra.mxu0 0.0
  %754 = vmatprep.subr.mxu0 0.0
  %755 = vmatpush2.msra.mxu0 0.0
  %756 = vmatprep.subr.mxu0 0.0
  %757 = vmatpush2.msra.mxu0 0.0
  %758 = vmatprep.mubr.f32.mxu0 0.0
  %759 = vmatmul.mubr.f32.gmra.mxu0 %v621
  %v760 = vpop.f32.mrf.mxu0
  %v761 = vadd.f32 0.0, %v760
  %v762 = vpop.f32.mrf.mxu0
  %763 = vdwg.mxu0
  %v764 = vadd.f32 %v527, %v690
  %v765 = vadd.f32 %v529, %v692
  %v766 = vadd.f32 %v598, %v761
  %v767 = vmax.f32 %v764, 0.0
  %v768 = vmax.f32 %v765, 0.0
  %v769 = vmax.f32 %v766, 0.0
  %v770 = vld [vmem:[%s4 + $0x1b8] sm:$0xff]
  %v771 = vld [vmem:[%s4 + $0x1c0] sm:$0xff]
  %v772 = vld [vmem:[%s4 + $0x1c8] sm:$0xff]
  %v773 = vld [vmem:[%s4 + $0x1d0] sm:$0xff]
  %v774 = vld [vmem:[%s4 + $0x1d8] sm:$0xff]
  %v775 = vld [vmem:[%s4 + $0x1e0] sm:$0xff]
  %v776 = vld [vmem:[%s4 + $0x1e8] sm:$0xff]
  %v777 = vld [vmem:[%s4 + $0x1f0] sm:$0xff]
  %v778 = vld [vmem:[%s4 + $0x1f8] sm:$0xff]
  %v779 = vld [vmem:[%s4 + $0x200] sm:$0xff]
  %v780 = vld [vmem:[%s4 + $0x208] sm:$0xff]
  %v781 = vld [vmem:[%s4 + $0x210] sm:$0xff]
  %v782 = vld [vmem:[%s4 + $0x218] sm:$0xff]
  %v783 = vld [vmem:[%s4 + $0x220] sm:$0xff]
  %v784 = vld [vmem:[%s4 + $0x228] sm:$0xff]
  %v785 = vld [vmem:[%s4 + $0x230] sm:$0xff]
  %v786 = vld [vmem:[%s4 + $0x238] sm:$0xff]
  %v787 = vld [vmem:[%s4 + $0x240] sm:$0xff]
  %v788 = vld [vmem:[%s4 + $0x248] sm:$0xff]
  %v789 = vld [vmem:[%s4 + $0x250] sm:$0xff]
  %v790 = vld [vmem:[%s4 + $0x258] sm:$0xff]
  %v791 = vld [vmem:[%s4 + $0x260] sm:$0xff]
  %v792 = vld [vmem:[%s4 + $0x268] sm:$0xff]
  %v793 = vld [vmem:[%s4 + $0x270] sm:$0xff]
  %v794 = vld [vmem:[%s4 + $0x278] sm:$0xff]
  %v795 = vld [vmem:[%s4 + $0x280] sm:$0xff]
  %v796 = vld [vmem:[%s4 + $0x288] sm:$0xff]
  %v797 = vld [vmem:[%s4 + $0x290] sm:$0xff]
  %v798 = vld [vmem:[%s4 + $0x298] sm:$0xff]
  %v799 = vld [vmem:[%s4 + $0x2a0] sm:$0xff]
  %v800 = vld [vmem:[%s4 + $0x2a8] sm:$0xff]
  %v801 = vld [vmem:[%s4 + $0x2b0] sm:$0xff]
  %v802 = vld [vmem:[%s4 + $0x2b8] sm:$0xff]
  %v803 = vld [vmem:[%s4 + $0x2c0] sm:$0xff]
  %v804 = vld [vmem:[%s4 + $0x2c8] sm:$0xff]
  %v805 = vld [vmem:[%s4 + $0x2d0] sm:$0xff]
  %v806 = vld [vmem:[%s4 + $0x2d8] sm:$0xff]
  %v807 = vld [vmem:[%s4 + $0x2e0] sm:$0xff]
  %v808 = vld [vmem:[%s4 + $0x2e8] sm:$0xff]
  %v809 = vld [vmem:[%s4 + $0x2f0] sm:$0xff]
  %v810 = vld [vmem:[%s4 + $0x2f8] sm:$0xff]
  %v811 = vld [vmem:[%s4 + $0x300] sm:$0xff]
  %v812 = vld [vmem:[%s4 + $0x308] sm:$0xff]
  %v813 = vld [vmem:[%s4 + $0x310] sm:$0xff]
  %v814 = vld [vmem:[%s4 + $0x318] sm:$0xff]
  %v815 = vld [vmem:[%s4 + $0x320] sm:$0xff]
  %v816 = vld [vmem:[%s4 + $0x328] sm:$0xff]
  %v817 = vld [vmem:[%s4 + $0x330] sm:$0xff]
  %v818 = vld [vmem:[%s4 + $0x338] sm:$0x1]
  %v819 = vlaneseq
  %v820 = vshrl.u32 %v819, 7
  %v821 = vsub.s32 0, %v820
  %v822 = vrot.slane %v818, %v821
  %823 = vmatprep.subr.mxu0 0.0
  %824 = vmatpush1.msra.mxu0 %v785
  %825 = vmatprep.subr.mxu0 0.0
  %826 = vmatpush1.msra.mxu0 %v784
  %827 = vmatprep.subr.mxu0 0.0
  %828 = vmatpush1.msra.mxu0 %v783
  %829 = vmatprep.subr.mxu0 0.0
  %830 = vmatpush1.msra.mxu0 %v782
  %831 = vmatprep.subr.mxu0 0.0
  %832 = vmatpush1.msra.mxu0 %v781
  %833 = vmatprep.subr.mxu0 0.0
  %834 = vmatpush1.msra.mxu0 %v780
  %835 = vmatprep.subr.mxu0 0.0
  %836 = vmatpush1.msra.mxu0 %v779
  %837 = vmatprep.subr.mxu0 0.0
  %838 = vmatpush1.msra.mxu0 %v778
  %839 = vmatprep.subr.mxu0 0.0
  %840 = vmatpush1.msra.mxu0 %v777
  %841 = vmatprep.subr.mxu0 0.0
  %842 = vmatpush1.msra.mxu0 %v776
  %843 = vmatprep.subr.mxu0 0.0
  %844 = vmatpush1.msra.mxu0 %v775
  %845 = vmatprep.subr.mxu0 0.0
  %846 = vmatpush1.msra.mxu0 %v774
  %847 = vmatprep.subr.mxu0 0.0
  %848 = vmatpush1.msra.mxu0 %v773
  %849 = vmatprep.subr.mxu0 0.0
  %850 = vmatpush1.msra.mxu0 %v772
  %851 = vmatprep.subr.mxu0 0.0
  %852 = vmatpush1.msra.mxu0 %v771
  %853 = vmatprep.subr.mxu0 0.0
  %854 = vmatpush1.msra.mxu0 %v770
  %855 = vmatprep.subr.mxu0 0.0
  %856 = vmatpush2.msra.mxu0 %v801
  %857 = vmatprep.subr.mxu0 0.0
  %858 = vmatpush2.msra.mxu0 %v800
  %859 = vmatprep.subr.mxu0 0.0
  %860 = vmatpush2.msra.mxu0 %v799
  %861 = vmatprep.subr.mxu0 0.0
  %862 = vmatpush2.msra.mxu0 %v798
  %863 = vmatprep.subr.mxu0 0.0
  %864 = vmatpush2.msra.mxu0 %v797
  %865 = vmatprep.subr.mxu0 0.0
  %866 = vmatpush2.msra.mxu0 %v796
  %867 = vmatprep.subr.mxu0 0.0
  %868 = vmatpush2.msra.mxu0 %v795
  %869 = vmatprep.subr.mxu0 0.0
  %870 = vmatpush2.msra.mxu0 %v794
  %871 = vmatprep.subr.mxu0 0.0
  %872 = vmatpush2.msra.mxu0 %v793
  %873 = vmatprep.subr.mxu0 0.0
  %874 = vmatpush2.msra.mxu0 %v792
  %875 = vmatprep.subr.mxu0 0.0
  %876 = vmatpush2.msra.mxu0 %v791
  %877 = vmatprep.subr.mxu0 0.0
  %878 = vmatpush2.msra.mxu0 %v790
  %879 = vmatprep.subr.mxu0 0.0
  %880 = vmatpush2.msra.mxu0 %v789
  %881 = vmatprep.subr.mxu0 0.0
  %882 = vmatpush2.msra.mxu0 %v788
  %883 = vmatprep.subr.mxu0 0.0
  %884 = vmatpush2.msra.mxu0 %v787
  %885 = vmatprep.subr.mxu0 0.0
  %886 = vmatpush2.msra.mxu0 %v786
  %887 = vmatprep.mubr.f32.mxu0 %v768
  %888 = vmatmul.mubr.f32.gmra.mxu0 %v767
  %v889 = vpop.f32.mrf.mxu0
  %v890 = vadd.f32 %v822, %v889
  %v891 = vpop.f32.mrf.mxu0
  %892 = vdwg.mxu0
  %893 = vmatprep.subr.mxu0 0.0
  %894 = vmatpush1.msra.mxu0 %v817
  %895 = vmatprep.subr.mxu0 0.0
  %896 = vmatpush1.msra.mxu0 %v816
  %897 = vmatprep.subr.mxu0 0.0
  %898 = vmatpush1.msra.mxu0 %v815
  %899 = vmatprep.subr.mxu0 0.0
  %900 = vmatpush1.msra.mxu0 %v814
  %901 = vmatprep.subr.mxu0 0.0
  %902 = vmatpush1.msra.mxu0 %v813
  %903 = vmatprep.subr.mxu0 0.0
  %904 = vmatpush1.msra.mxu0 %v812
  %905 = vmatprep.subr.mxu0 0.0
  %906 = vmatpush1.msra.mxu0 %v811
  %907 = vmatprep.subr.mxu0 0.0
  %908 = vmatpush1.msra.mxu0 %v810
  %909 = vmatprep.subr.mxu0 0.0
  %910 = vmatpush1.msra.mxu0 %v809
  %911 = vmatprep.subr.mxu0 0.0
  %912 = vmatpush1.msra.mxu0 %v808
  %913 = vmatprep.subr.mxu0 0.0
  %914 = vmatpush1.msra.mxu0 %v807
  %915 = vmatprep.subr.mxu0 0.0
  %916 = vmatpush1.msra.mxu0 %v806
  %917 = vmatprep.subr.mxu0 0.0
  %918 = vmatpush1.msra.mxu0 %v805
  %919 = vmatprep.subr.mxu0 0.0
  %920 = vmatpush1.msra.mxu0 %v804
  %921 = vmatprep.subr.mxu0 0.0
  %922 = vmatpush1.msra.mxu0 %v803
  %923 = vmatprep.subr.mxu0 0.0
  %924 = vmatpush1.msra.mxu0 %v802
  %925 = vmatprep.subr.mxu0 0.0
  %926 = vmatpush2.msra.mxu0 0.0
  %927 = vmatprep.subr.mxu0 0.0
  %928 = vmatpush2.msra.mxu0 0.0
  %929 = vmatprep.subr.mxu0 0.0
  %930 = vmatpush2.msra.mxu0 0.0
  %931 = vmatprep.subr.mxu0 0.0
  %932 = vmatpush2.msra.mxu0 0.0
  %933 = vmatprep.subr.mxu0 0.0
  %934 = vmatpush2.msra.mxu0 0.0
  %935 = vmatprep.subr.mxu0 0.0
  %936 = vmatpush2.msra.mxu0 0.0
  %937 = vmatprep.subr.mxu0 0.0
  %938 = vmatpush2.msra.mxu0 0.0
  %939 = vmatprep.subr.mxu0 0.0
  %940 = vmatpush2.msra.mxu0 0.0
  %941 = vmatprep.subr.mxu0 0.0
  %942 = vmatpush2.msra.mxu0 0.0
  %943 = vmatprep.subr.mxu0 0.0
  %944 = vmatpush2.msra.mxu0 0.0
  %945 = vmatprep.subr.mxu0 0.0
  %946 = vmatpush2.msra.mxu0 0.0
  %947 = vmatprep.subr.mxu0 0.0
  %948 = vmatpush2.msra.mxu0 0.0
  %949 = vmatprep.subr.mxu0 0.0
  %950 = vmatpush2.msra.mxu0 0.0
  %951 = vmatprep.subr.mxu0 0.0
  %952 = vmatpush2.msra.mxu0 0.0
  %953 = vmatprep.subr.mxu0 0.0
  %954 = vmatpush2.msra.mxu0 0.0
  %955 = vmatprep.subr.mxu0 0.0
  %956 = vmatpush2.msra.mxu0 0.0
  %957 = vmatprep.mubr.f32.mxu0 0.0
  %958 = vmatmul.mubr.f32.gmra.mxu0 %v769
  %v959 = vpop.f32.mrf.mxu0
  %v960 = vadd.f32 %v890, %v959
  %v961 = vpop.f32.mrf.mxu0
  %962 = vdwg.mxu0
  %v963 = vmax.f32 %v960, 0.0
  %v964 = vld [vmem:[%s4 + $0x340] sm:$0xff]
  %v965 = vld [vmem:[%s4 + $0x348] sm:$0xff]
  %v966 = vld [vmem:[%s4 + $0x350] sm:$0xff]
  %v967 = vld [vmem:[%s4 + $0x358] sm:$0xff]
  %v968 = vld [vmem:[%s4 + $0x360] sm:$0xff]
  %v969 = vld [vmem:[%s4 + $0x368] sm:$0xff]
  %v971 = vsel %vm619, %v963, 0
  %973 = vmatprep.subr.mxu0 0.0
  %974 = vmatpush1.msra.mxu0 0.0
  %975 = vmatprep.subr.mxu0 0.0
  %976 = vmatpush1.msra.mxu0 0.0
  %977 = vmatprep.subr.mxu0 0.0
  %978 = vmatpush1.msra.mxu0 0.0
  %979 = vmatprep.subr.mxu0 0.0
  %980 = vmatpush1.msra.mxu0 0.0
  %981 = vmatprep.subr.mxu0 0.0
  %982 = vmatpush1.msra.mxu0 0.0
  %983 = vmatprep.subr.mxu0 0.0
  %984 = vmatpush1.msra.mxu0 0.0
  %985 = vmatprep.subr.mxu0 0.0
  %986 = vmatpush1.msra.mxu0 0.0
  %987 = vmatprep.subr.mxu0 0.0
  %988 = vmatpush1.msra.mxu0 0.0
  %989 = vmatprep.subr.mxu0 0.0
  %990 = vmatpush1.msra.mxu0 0.0
  %991 = vmatprep.subr.mxu0 0.0
  %992 = vmatpush1.msra.mxu0 0.0
  %993 = vmatprep.subr.mxu0 0.0
  %994 = vmatpush1.msra.mxu0 %v969
  %995 = vmatprep.subr.mxu0 0.0
  %996 = vmatpush1.msra.mxu0 %v968
  %997 = vmatprep.subr.mxu0 0.0
  %998 = vmatpush1.msra.mxu0 %v967
  %999 = vmatprep.subr.mxu0 0.0
  %1000 = vmatpush1.msra.mxu0 %v966
  %1001 = vmatprep.subr.mxu0 0.0
  %1002 = vmatpush1.msra.mxu0 %v965
  %1003 = vmatprep.subr.mxu0 0.0
  %1004 = vmatpush1.msra.mxu0 %v964
  %1005 = vmatprep.subr.mxu0 0.0
  %1006 = vmatpush2.msra.mxu0 0.0
  %1007 = vmatprep.subr.mxu0 0.0
  %1008 = vmatpush2.msra.mxu0 0.0
  %1009 = vmatprep.subr.mxu0 0.0
  %1010 = vmatpush2.msra.mxu0 0.0
  %1011 = vmatprep.subr.mxu0 0.0
  %1012 = vmatpush2.msra.mxu0 0.0
  %1013 = vmatprep.subr.mxu0 0.0
  %1014 = vmatpush2.msra.mxu0 0.0
  %1015 = vmatprep.subr.mxu0 0.0
  %1016 = vmatpush2.msra.mxu0 0.0
  %1017 = vmatprep.subr.mxu0 0.0
  %1018 = vmatpush2.msra.mxu0 0.0
  %1019 = vmatprep.subr.mxu0 0.0
  %1020 = vmatpush2.msra.mxu0 0.0
  %1021 = vmatprep.subr.mxu0 0.0
  %1022 = vmatpush2.msra.mxu0 0.0
  %1023 = vmatprep.subr.mxu0 0.0
  %1024 = vmatpush2.msra.mxu0 0.0
  %1025 = vmatprep.subr.mxu0 0.0
  %1026 = vmatpush2.msra.mxu0 0.0
  %1027 = vmatprep.subr.mxu0 0.0
  %1028 = vmatpush2.msra.mxu0 0.0
  %1029 = vmatprep.subr.mxu0 0.0
  %1030 = vmatpush2.msra.mxu0 0.0
  %1031 = vmatprep.subr.mxu0 0.0
  %1032 = vmatpush2.msra.mxu0 0.0
  %1033 = vmatprep.subr.mxu0 0.0
  %1034 = vmatpush2.msra.mxu0 0.0
  %1035 = vmatprep.subr.mxu0 0.0
  %1036 = vmatpush2.msra.mxu0 0.0
  %1037 = vmatprep.mubr.f32.mxu0 0.0
  %1038 = vmatmul.mubr.f32.gmra.mxu0 %v971
  %v1039 = vpop.f32.mrf.mxu0
  %v1040 = vadd.f32 0.0, %v1039
  %v1041 = vpop.f32.mrf.mxu0
  %1042 = vdwg.mxu0
  %1043 = vmatprep.subr.mxu0 0.0
  %1044 = vmatpush1.msra.mxu0 0.0
  %1045 = vmatprep.subr.mxu0 0.0
  %1046 = vmatpush1.msra.mxu0 0.0
  %1047 = vmatprep.subr.mxu0 0.0
  %1048 = vmatpush1.msra.mxu0 0.0
  %1049 = vmatprep.subr.mxu0 0.0
  %1050 = vmatpush1.msra.mxu0 0.0
  %1051 = vmatprep.subr.mxu0 0.0
  %1052 = vmatpush1.msra.mxu0 0.0
  %1053 = vmatprep.subr.mxu0 0.0
  %1054 = vmatpush1.msra.mxu0 0.0
  %1055 = vmatprep.subr.mxu0 0.0
  %1056 = vmatpush1.msra.mxu0 0.0
  %1057 = vmatprep.subr.mxu0 0.0
  %1058 = vmatpush1.msra.mxu0 0.0
  %1059 = vmatprep.subr.mxu0 0.0
  %1060 = vmatpush1.msra.mxu0 0.0
  %1061 = vmatprep.subr.mxu0 0.0
  %1062 = vmatpush1.msra.mxu0 0.0
  %1063 = vmatprep.subr.mxu0 0.0
  %1064 = vmatpush1.msra.mxu0 %v408
  %1065 = vmatprep.subr.mxu0 0.0
  %1066 = vmatpush1.msra.mxu0 %v407
  %1067 = vmatprep.subr.mxu0 0.0
  %1068 = vmatpush1.msra.mxu0 %v406
  %1069 = vmatprep.subr.mxu0 0.0
  %1070 = vmatpush1.msra.mxu0 %v405
  %1071 = vmatprep.subr.mxu0 0.0
  %1072 = vmatpush1.msra.mxu0 %v404
  %1073 = vmatprep.subr.mxu0 0.0
  %1074 = vmatpush1.msra.mxu0 %v403
  %1075 = vmatprep.subr.mxu0 0.0
  %1076 = vmatpush2.msra.mxu0 0.0
  %1077 = vmatprep.subr.mxu0 0.0
  %1078 = vmatpush2.msra.mxu0 0.0
  %1079 = vmatprep.subr.mxu0 0.0
  %1080 = vmatpush2.msra.mxu0 0.0
  %1081 = vmatprep.subr.mxu0 0.0
  %1082 = vmatpush2.msra.mxu0 0.0
  %1083 = vmatprep.subr.mxu0 0.0
  %1084 = vmatpush2.msra.mxu0 0.0
  %1085 = vmatprep.subr.mxu0 0.0
  %1086 = vmatpush2.msra.mxu0 0.0
  %1087 = vmatprep.subr.mxu0 0.0
  %1088 = vmatpush2.msra.mxu0 0.0
  %1089 = vmatprep.subr.mxu0 0.0
  %1090 = vmatpush2.msra.mxu0 0.0
  %1091 = vmatprep.subr.mxu0 0.0
  %1092 = vmatpush2.msra.mxu0 0.0
  %1093 = vmatprep.subr.mxu0 0.0
  %1094 = vmatpush2.msra.mxu0 0.0
  %1095 = vmatprep.subr.mxu0 0.0
  %1096 = vmatpush2.msra.mxu0 0.0
  %1097 = vmatprep.subr.mxu0 0.0
  %1098 = vmatpush2.msra.mxu0 0.0
  %1099 = vmatprep.subr.mxu0 0.0
  %1100 = vmatpush2.msra.mxu0 0.0
  %1101 = vmatprep.subr.mxu0 0.0
  %1102 = vmatpush2.msra.mxu0 0.0
  %1103 = vmatprep.subr.mxu0 0.0
  %1104 = vmatpush2.msra.mxu0 0.0
  %1105 = vmatprep.subr.mxu0 0.0
  %1106 = vmatpush2.msra.mxu0 0.0
  %1107 = vmatprep.mubr.f32.mxu0 0.0
  %1108 = vmatmul.mubr.f32.gmra.mxu0 %v621
  %v1109 = vpop.f32.mrf.mxu0
  %v1110 = vadd.f32 %v1040, %v1109
  %v1111 = vpop.f32.mrf.mxu0
  %1112 = vdwg.mxu0
  %v1113 = vld [vmem:[%s2] sm:$0x3]
  %v1114 = vld [vmem:[%s3 + $0x1b0] sm:$0xff]
  %v1115 = vld [vmem:[%s3 + $0x1b8] sm:$0xff]
  %v1116 = vld [vmem:[%s3 + $0x1c8] sm:$0xff]
  %v1117 = vld [vmem:[%s3 + $0x1d0] sm:$0xff]
  %v1118 = vld [vmem:[%s3 + $0x1e0] sm:$0x1f]
  %v1119 = vld [vmem:[%s3 + $0x1e8] sm:$0x1f]
  %s1120 = scalar_lea.vmem %s3, 504
  %v1121 = vld [vmem:[%s1120] ss:$8 sm:$0x3]
  %v1123 = vlaneseq
  %v1124 = vshrl.u32 %v1123, 7
  %v1125 = vsub.s32 0, %v1124
  %v1126 = vrot.slane %v1121, %v1125
  %v1127 = vlaneseq
  %v1128 = vshrl.u32 %v1127, 7
  %v1129 = vsub.s32 1, %v1128
  %v1130 = vrot.slane %v1121, %v1129
  %vm1133 = vcmask 171008
  %v1135 = vsel %vm1133, %v1113, 0
  %vm1137 = vcmask 1044480
  %v1139 = vsel %vm1137, %v1118, 0
  %v1142 = vsel %vm1137, %v1119, 0
  %1144 = vmatprep.subr.mxu0 0.0
  %1145 = vmatpush1.msra.mxu0 0.0
  %1146 = vmatprep.subr.mxu0 0.0
  %1147 = vmatpush1.msra.mxu0 0.0
  %1148 = vmatprep.subr.mxu0 0.0
  %1149 = vmatpush1.msra.mxu0 0.0
  %1150 = vmatprep.subr.mxu0 0.0
  %1151 = vmatpush1.msra.mxu0 0.0
  %1152 = vmatprep.subr.mxu0 0.0
  %1153 = vmatpush1.msra.mxu0 0.0
  %1154 = vmatprep.subr.mxu0 0.0
  %1155 = vmatpush1.msra.mxu0 0.0
  %1156 = vmatprep.subr.mxu0 0.0
  %1157 = vmatpush1.msra.mxu0 0.0
  %1158 = vmatprep.subr.mxu0 0.0
  %1159 = vmatpush1.msra.mxu0 0.0
  %1160 = vmatprep.subr.mxu0 0.0
  %1161 = vmatpush1.msra.mxu0 0.0
  %1162 = vmatprep.subr.mxu0 0.0
  %1163 = vmatpush1.msra.mxu0 0.0
  %1164 = vmatprep.subr.mxu0 0.0
  %1165 = vmatpush1.msra.mxu0 0.0
  %1166 = vmatprep.subr.mxu0 0.0
  %1167 = vmatpush1.msra.mxu0 0.0
  %1168 = vmatprep.subr.mxu0 0.0
  %1169 = vmatpush1.msra.mxu0 0.0
  %1170 = vmatprep.subr.mxu0 %v1142
  %1171 = vmatpush1.msra.mxu0 %v1139
  %1172 = vmatprep.subr.mxu0 %v1117
  %1173 = vmatpush1.msra.mxu0 %v1116
  %1174 = vmatprep.subr.mxu0 %v1115
  %1175 = vmatpush1.msra.mxu0 %v1114
  %1176 = vmatprep.subr.mxu0 0.0
  %1177 = vmatpush2.msra.mxu0 0.0
  %1178 = vmatprep.subr.mxu0 0.0
  %1179 = vmatpush2.msra.mxu0 0.0
  %1180 = vmatprep.subr.mxu0 0.0
  %1181 = vmatpush2.msra.mxu0 0.0
  %1182 = vmatprep.subr.mxu0 0.0
  %1183 = vmatpush2.msra.mxu0 0.0
  %1184 = vmatprep.subr.mxu0 0.0
  %1185 = vmatpush2.msra.mxu0 0.0
  %1186 = vmatprep.subr.mxu0 0.0
  %1187 = vmatpush2.msra.mxu0 0.0
  %1188 = vmatprep.subr.mxu0 0.0
  %1189 = vmatpush2.msra.mxu0 0.0
  %1190 = vmatprep.subr.mxu0 0.0
  %1191 = vmatpush2.msra.mxu0 0.0
  %1192 = vmatprep.subr.mxu0 0.0
  %1193 = vmatpush2.msra.mxu0 0.0
  %1194 = vmatprep.subr.mxu0 0.0
  %1195 = vmatpush2.msra.mxu0 0.0
  %1196 = vmatprep.subr.mxu0 0.0
  %1197 = vmatpush2.msra.mxu0 0.0
  %1198 = vmatprep.subr.mxu0 0.0
  %1199 = vmatpush2.msra.mxu0 0.0
  %1200 = vmatprep.subr.mxu0 0.0
  %1201 = vmatpush2.msra.mxu0 0.0
  %1202 = vmatprep.subr.mxu0 0.0
  %1203 = vmatpush2.msra.mxu0 0.0
  %1204 = vmatprep.subr.mxu0 0.0
  %1205 = vmatpush2.msra.mxu0 0.0
  %1206 = vmatprep.subr.mxu0 0.0
  %1207 = vmatpush2.msra.mxu0 0.0
  %1208 = vmatprep.mubr.f32.mxu0 0.0
  %1209 = vmatmul.mubr.f32.gmra.mxu0 %v1135
  %v1210 = vpop.f32.mrf.mxu0
  %v1211 = vadd.f32 %v1126, %v1210
  %v1212 = vpop.f32.mrf.mxu0
  %v1213 = vadd.f32 %v1130, %v1212
  %1214 = vdwg.mxu0
  %v1215 = vld [vmem:[%s3 + $0x210] sm:$0xff]
  %v1216 = vld [vmem:[%s3 + $0x218] sm:$0xff]
  %v1217 = vld [vmem:[%s3 + $0x228] sm:$0xff]
  %v1218 = vld [vmem:[%s3 + $0x230] sm:$0xff]
  %v1219 = vld [vmem:[%s3 + $0x240] sm:$0xff]
  %v1220 = vld [vmem:[%s3 + $0x248] sm:$0xff]
  %v1221 = vld [vmem:[%s3 + $0x258] sm:$0xff]
  %v1222 = vld [vmem:[%s3 + $0x260] sm:$0xff]
  %v1223 = vld [vmem:[%s3 + $0x270] sm:$0xff]
  %v1224 = vld [vmem:[%s3 + $0x278] sm:$0xff]
  %v1225 = vld [vmem:[%s3 + $0x288] sm:$0xff]
  %v1226 = vld [vmem:[%s3 + $0x290] sm:$0xff]
  %1227 = vmatprep.subr.mxu0 0.0
  %1228 = vmatpush1.msra.mxu0 0.0
  %1229 = vmatprep.subr.mxu0 0.0
  %1230 = vmatpush1.msra.mxu0 0.0
  %1231 = vmatprep.subr.mxu0 0.0
  %1232 = vmatpush1.msra.mxu0 0.0
  %1233 = vmatprep.subr.mxu0 0.0
  %1234 = vmatpush1.msra.mxu0 0.0
  %1235 = vmatprep.subr.mxu0 0.0
  %1236 = vmatpush1.msra.mxu0 0.0
  %1237 = vmatprep.subr.mxu0 0.0
  %1238 = vmatpush1.msra.mxu0 0.0
  %1239 = vmatprep.subr.mxu0 0.0
  %1240 = vmatpush1.msra.mxu0 0.0
  %1241 = vmatprep.subr.mxu0 0.0
  %1242 = vmatpush1.msra.mxu0 0.0
  %1243 = vmatprep.subr.mxu0 0.0
  %1244 = vmatpush1.msra.mxu0 0.0
  %1245 = vmatprep.subr.mxu0 0.0
  %1246 = vmatpush1.msra.mxu0 0.0
  %1247 = vmatprep.subr.mxu0 %v1226
  %1248 = vmatpush1.msra.mxu0 %v1225
  %1249 = vmatprep.subr.mxu0 %v1224
  %1250 = vmatpush1.msra.mxu0 %v1223
  %1251 = vmatprep.subr.mxu0 %v1222
  %1252 = vmatpush1.msra.mxu0 %v1221
  %1253 = vmatprep.subr.mxu0 %v1220
  %1254 = vmatpush1.msra.mxu0 %v1219
  %1255 = vmatprep.subr.mxu0 %v1218
  %1256 = vmatpush1.msra.mxu0 %v1217
  %1257 = vmatprep.subr.mxu0 %v1216
  %1258 = vmatpush1.msra.mxu0 %v1215
  %1259 = vmatprep.subr.mxu0 0.0
  %1260 = vmatpush2.msra.mxu0 0.0
  %1261 = vmatprep.subr.mxu0 0.0
  %1262 = vmatpush2.msra.mxu0 0.0
  %1263 = vmatprep.subr.mxu0 0.0
  %1264 = vmatpush2.msra.mxu0 0.0
  %1265 = vmatprep.subr.mxu0 0.0
  %1266 = vmatpush2.msra.mxu0 0.0
  %1267 = vmatprep.subr.mxu0 0.0
  %1268 = vmatpush2.msra.mxu0 0.0
  %1269 = vmatprep.subr.mxu0 0.0
  %1270 = vmatpush2.msra.mxu0 0.0
  %1271 = vmatprep.subr.mxu0 0.0
  %1272 = vmatpush2.msra.mxu0 0.0
  %1273 = vmatprep.subr.mxu0 0.0
  %1274 = vmatpush2.msra.mxu0 0.0
  %1275 = vmatprep.subr.mxu0 0.0
  %1276 = vmatpush2.msra.mxu0 0.0
  %1277 = vmatprep.subr.mxu0 0.0
  %1278 = vmatpush2.msra.mxu0 0.0
  %1279 = vmatprep.subr.mxu0 0.0
  %1280 = vmatpush2.msra.mxu0 0.0
  %1281 = vmatprep.subr.mxu0 0.0
  %1282 = vmatpush2.msra.mxu0 0.0
  %1283 = vmatprep.subr.mxu0 0.0
  %1284 = vmatpush2.msra.mxu0 0.0
  %1285 = vmatprep.subr.mxu0 0.0
  %1286 = vmatpush2.msra.mxu0 0.0
  %1287 = vmatprep.subr.mxu0 0.0
  %1288 = vmatpush2.msra.mxu0 0.0
  %1289 = vmatprep.subr.mxu0 0.0
  %1290 = vmatpush2.msra.mxu0 0.0
  %1291 = vmatprep.mubr.f32.mxu0 0.0
  %1292 = vmatmul.mubr.f32.gmra.mxu0 %v971
  %v1293 = vpop.f32.mrf.mxu0
  %v1294 = vadd.f32 0.0, %v1293
  %v1295 = vpop.f32.mrf.mxu0
  %v1296 = vadd.f32 0.0, %v1295
  %1297 = vdwg.mxu0
  %v1298 = vadd.f32 %v1211, %v1294
  %v1299 = vadd.f32 %v1213, %v1296
  %v1300 = vmax.f32 %v1298, 0.0
  %v1301 = vmax.f32 %v1299, 0.0
  %v1302 = vld [vmem:[%s4 + $0x370] sm:$0xff]
  %v1303 = vld [vmem:[%s4 + $0x378] sm:$0xff]
  %v1304 = vld [vmem:[%s4 + $0x380] sm:$0xff]
  %v1305 = vld [vmem:[%s4 + $0x388] sm:$0xff]
  %v1306 = vld [vmem:[%s4 + $0x390] sm:$0xff]
  %v1307 = vld [vmem:[%s4 + $0x398] sm:$0xff]
  %v1308 = vld [vmem:[%s4 + $0x3a0] sm:$0xff]
  %v1309 = vld [vmem:[%s4 + $0x3a8] sm:$0xff]
  %v1310 = vld [vmem:[%s4 + $0x3b0] sm:$0xff]
  %v1311 = vld [vmem:[%s4 + $0x3b8] sm:$0xff]
  %v1312 = vld [vmem:[%s4 + $0x3c0] sm:$0xff]
  %v1313 = vld [vmem:[%s4 + $0x3c8] sm:$0xff]
  %v1314 = vld [vmem:[%s4 + $0x3d0] sm:$0xff]
  %v1315 = vld [vmem:[%s4 + $0x3d8] sm:$0xff]
  %v1316 = vld [vmem:[%s4 + $0x3e0] sm:$0xff]
  %v1317 = vld [vmem:[%s4 + $0x3e8] sm:$0xff]
  %v1318 = vld [vmem:[%s4 + $0x3f0] sm:$0xff]
  %v1319 = vld [vmem:[%s4 + $0x3f8] sm:$0xff]
  %v1320 = vld [vmem:[%s4 + $0x400] sm:$0xff]
  %v1321 = vld [vmem:[%s4 + $0x408] sm:$0xff]
  %v1322 = vld [vmem:[%s4 + $0x410] sm:$0xff]
  %v1323 = vld [vmem:[%s4 + $0x418] sm:$0xff]
  %v1324 = vld [vmem:[%s4 + $0x420] sm:$0xff]
  %v1325 = vld [vmem:[%s4 + $0x428] sm:$0xff]
  %v1326 = vld [vmem:[%s4 + $0x430] sm:$0x1]
  %v1327 = vlaneseq
  %v1328 = vshrl.u32 %v1327, 7
  %v1329 = vsub.s32 0, %v1328
  %v1330 = vrot.slane %v1326, %v1329
  %vm1331 = vcmask 523264
  %v1333 = vsel %vm1331, %v1301, 0
  %1335 = vmatprep.subr.mxu0 0.0
  %1336 = vmatpush1.msra.mxu0 %v1317
  %1337 = vmatprep.subr.mxu0 0.0
  %1338 = vmatpush1.msra.mxu0 %v1316
  %1339 = vmatprep.subr.mxu0 0.0
  %1340 = vmatpush1.msra.mxu0 %v1315
  %1341 = vmatprep.subr.mxu0 0.0
  %1342 = vmatpush1.msra.mxu0 %v1314
  %1343 = vmatprep.subr.mxu0 0.0
  %1344 = vmatpush1.msra.mxu0 %v1313
  %1345 = vmatprep.subr.mxu0 0.0
  %1346 = vmatpush1.msra.mxu0 %v1312
  %1347 = vmatprep.subr.mxu0 0.0
  %1348 = vmatpush1.msra.mxu0 %v1311
  %1349 = vmatprep.subr.mxu0 0.0
  %1350 = vmatpush1.msra.mxu0 %v1310
  %1351 = vmatprep.subr.mxu0 0.0
  %1352 = vmatpush1.msra.mxu0 %v1309
  %1353 = vmatprep.subr.mxu0 0.0
  %1354 = vmatpush1.msra.mxu0 %v1308
  %1355 = vmatprep.subr.mxu0 0.0
  %1356 = vmatpush1.msra.mxu0 %v1307
  %1357 = vmatprep.subr.mxu0 0.0
  %1358 = vmatpush1.msra.mxu0 %v1306
  %1359 = vmatprep.subr.mxu0 0.0
  %1360 = vmatpush1.msra.mxu0 %v1305
  %1361 = vmatprep.subr.mxu0 0.0
  %1362 = vmatpush1.msra.mxu0 %v1304
  %1363 = vmatprep.subr.mxu0 0.0
  %1364 = vmatpush1.msra.mxu0 %v1303
  %1365 = vmatprep.subr.mxu0 0.0
  %1366 = vmatpush1.msra.mxu0 %v1302
  %1367 = vmatprep.subr.mxu0 0.0
  %1368 = vmatpush2.msra.mxu0 0.0
  %1369 = vmatprep.subr.mxu0 0.0
  %1370 = vmatpush2.msra.mxu0 0.0
  %1371 = vmatprep.subr.mxu0 0.0
  %1372 = vmatpush2.msra.mxu0 0.0
  %1373 = vmatprep.subr.mxu0 0.0
  %1374 = vmatpush2.msra.mxu0 0.0
  %1375 = vmatprep.subr.mxu0 0.0
  %1376 = vmatpush2.msra.mxu0 0.0
  %1377 = vmatprep.subr.mxu0 0.0
  %1378 = vmatpush2.msra.mxu0 0.0
  %1379 = vmatprep.subr.mxu0 0.0
  %1380 = vmatpush2.msra.mxu0 0.0
  %1381 = vmatprep.subr.mxu0 0.0
  %1382 = vmatpush2.msra.mxu0 0.0
  %1383 = vmatprep.subr.mxu0 0.0
  %1384 = vmatpush2.msra.mxu0 %v1325
  %1385 = vmatprep.subr.mxu0 0.0
  %1386 = vmatpush2.msra.mxu0 %v1324
  %1387 = vmatprep.subr.mxu0 0.0
  %1388 = vmatpush2.msra.mxu0 %v1323
  %1389 = vmatprep.subr.mxu0 0.0
  %1390 = vmatpush2.msra.mxu0 %v1322
  %1391 = vmatprep.subr.mxu0 0.0
  %1392 = vmatpush2.msra.mxu0 %v1321
  %1393 = vmatprep.subr.mxu0 0.0
  %1394 = vmatpush2.msra.mxu0 %v1320
  %1395 = vmatprep.subr.mxu0 0.0
  %1396 = vmatpush2.msra.mxu0 %v1319
  %1397 = vmatprep.subr.mxu0 0.0
  %1398 = vmatpush2.msra.mxu0 %v1318
  %1399 = vmatprep.mubr.f32.mxu0 %v1333
  %1400 = vmatmul.mubr.f32.gmra.mxu0 %v1300
  %v1401 = vpop.f32.mrf.mxu0
  %v1402 = vadd.f32 %v1330, %v1401
  %v1403 = vpop.f32.mrf.mxu0
  %1404 = vdwg.mxu0
  %v1405 = vmax.f32 %v1402, 0.0
  %v1406 = vld [vmem:[%s4 + $0x438] sm:$0xff]
  %v1407 = vld [vmem:[%s4 + $0x440] sm:$0xff]
  %v1408 = vld [vmem:[%s4 + $0x448] sm:$0xff]
  %vm1409 = vcmask 195584
  %v1411 = vsel %vm1409, %v1405, 0
  %1413 = vmatprep.subr.mxu0 0.0
  %1414 = vmatpush1.msra.mxu0 0.0
  %1415 = vmatprep.subr.mxu0 0.0
  %1416 = vmatpush1.msra.mxu0 0.0
  %1417 = vmatprep.subr.mxu0 0.0
  %1418 = vmatpush1.msra.mxu0 0.0
  %1419 = vmatprep.subr.mxu0 0.0
  %1420 = vmatpush1.msra.mxu0 0.0
  %1421 = vmatprep.subr.mxu0 0.0
  %1422 = vmatpush1.msra.mxu0 0.0
  %1423 = vmatprep.subr.mxu0 0.0
  %1424 = vmatpush1.msra.mxu0 0.0
  %1425 = vmatprep.subr.mxu0 0.0
  %1426 = vmatpush1.msra.mxu0 0.0
  %1427 = vmatprep.subr.mxu0 0.0
  %1428 = vmatpush1.msra.mxu0 0.0
  %1429 = vmatprep.subr.mxu0 0.0
  %1430 = vmatpush1.msra.mxu0 0.0
  %1431 = vmatprep.subr.mxu0 0.0
  %1432 = vmatpush1.msra.mxu0 0.0
  %1433 = vmatprep.subr.mxu0 0.0
  %1434 = vmatpush1.msra.mxu0 0.0
  %1435 = vmatprep.subr.mxu0 0.0
  %1436 = vmatpush1.msra.mxu0 0.0
  %1437 = vmatprep.subr.mxu0 0.0
  %1438 = vmatpush1.msra.mxu0 0.0
  %1439 = vmatprep.subr.mxu0 0.0
  %1440 = vmatpush1.msra.mxu0 %v1408
  %1441 = vmatprep.subr.mxu0 0.0
  %1442 = vmatpush1.msra.mxu0 %v1407
  %1443 = vmatprep.subr.mxu0 0.0
  %1444 = vmatpush1.msra.mxu0 %v1406
  %1445 = vmatprep.subr.mxu0 0.0
  %1446 = vmatpush2.msra.mxu0 0.0
  %1447 = vmatprep.subr.mxu0 0.0
  %1448 = vmatpush2.msra.mxu0 0.0
  %1449 = vmatprep.subr.mxu0 0.0
  %1450 = vmatpush2.msra.mxu0 0.0
  %1451 = vmatprep.subr.mxu0 0.0
  %1452 = vmatpush2.msra.mxu0 0.0
  %1453 = vmatprep.subr.mxu0 0.0
  %1454 = vmatpush2.msra.mxu0 0.0
  %1455 = vmatprep.subr.mxu0 0.0
  %1456 = vmatpush2.msra.mxu0 0.0
  %1457 = vmatprep.subr.mxu0 0.0
  %1458 = vmatpush2.msra.mxu0 0.0
  %1459 = vmatprep.subr.mxu0 0.0
  %1460 = vmatpush2.msra.mxu0 0.0
  %1461 = vmatprep.subr.mxu0 0.0
  %1462 = vmatpush2.msra.mxu0 0.0
  %1463 = vmatprep.subr.mxu0 0.0
  %1464 = vmatpush2.msra.mxu0 0.0
  %1465 = vmatprep.subr.mxu0 0.0
  %1466 = vmatpush2.msra.mxu0 0.0
  %1467 = vmatprep.subr.mxu0 0.0
  %1468 = vmatpush2.msra.mxu0 0.0
  %1469 = vmatprep.subr.mxu0 0.0
  %1470 = vmatpush2.msra.mxu0 0.0
  %1471 = vmatprep.subr.mxu0 0.0
  %1472 = vmatpush2.msra.mxu0 0.0
  %1473 = vmatprep.subr.mxu0 0.0
  %1474 = vmatpush2.msra.mxu0 0.0
  %1475 = vmatprep.subr.mxu0 0.0
  %1476 = vmatpush2.msra.mxu0 0.0
  %1477 = vmatprep.mubr.f32.mxu0 0.0
  %1478 = vmatmul.mubr.f32.gmra.mxu0 %v1411
  %v1479 = vpop.f32.mrf.mxu0
  %v1480 = vadd.f32 0.0, %v1479
  %v1481 = vpop.f32.mrf.mxu0
  %1482 = vdwg.mxu0
  %v1483 = vadd.f32 %v1110, %v1480
  %v1484 = vld [vmem:[%s4 + $0x450] sm:$0xff]
  %v1485 = vld [vmem:[%s4 + $0x458] sm:$0xff]
  %v1486 = vld [vmem:[%s4 + $0x460] sm:$0xff]
  %v1487 = vld [vmem:[%s4 + $0x468] sm:$0x1]
  %v1488 = vlaneseq
  %v1489 = vshrl.u32 %v1488, 7
  %v1490 = vsub.s32 0, %v1489
  %v1491 = vrot.slane %v1487, %v1490
  %v1493 = vsel %vm1409, %v1483, 0
  %1495 = vmatprep.subr.mxu0 0.0
  %1496 = vmatpush1.msra.mxu0 0.0
  %1497 = vmatprep.subr.mxu0 0.0
  %1498 = vmatpush1.msra.mxu0 0.0
  %1499 = vmatprep.subr.mxu0 0.0
  %1500 = vmatpush1.msra.mxu0 0.0
  %1501 = vmatprep.subr.mxu0 0.0
  %1502 = vmatpush1.msra.mxu0 0.0
  %1503 = vmatprep.subr.mxu0 0.0
  %1504 = vmatpush1.msra.mxu0 0.0
  %1505 = vmatprep.subr.mxu0 0.0
  %1506 = vmatpush1.msra.mxu0 0.0
  %1507 = vmatprep.subr.mxu0 0.0
  %1508 = vmatpush1.msra.mxu0 0.0
  %1509 = vmatprep.subr.mxu0 0.0
  %1510 = vmatpush1.msra.mxu0 0.0
  %1511 = vmatprep.subr.mxu0 0.0
  %1512 = vmatpush1.msra.mxu0 0.0
  %1513 = vmatprep.subr.mxu0 0.0
  %1514 = vmatpush1.msra.mxu0 0.0
  %1515 = vmatprep.subr.mxu0 0.0
  %1516 = vmatpush1.msra.mxu0 0.0
  %1517 = vmatprep.subr.mxu0 0.0
  %1518 = vmatpush1.msra.mxu0 0.0
  %1519 = vmatprep.subr.mxu0 0.0
  %1520 = vmatpush1.msra.mxu0 0.0
  %1521 = vmatprep.subr.mxu0 0.0
  %1522 = vmatpush1.msra.mxu0 %v1486
  %1523 = vmatprep.subr.mxu0 0.0
  %1524 = vmatpush1.msra.mxu0 %v1485
  %1525 = vmatprep.subr.mxu0 0.0
  %1526 = vmatpush1.msra.mxu0 %v1484
  %1527 = vmatprep.subr.mxu0 0.0
  %1528 = vmatpush2.msra.mxu0 0.0
  %1529 = vmatprep.subr.mxu0 0.0
  %1530 = vmatpush2.msra.mxu0 0.0
  %1531 = vmatprep.subr.mxu0 0.0
  %1532 = vmatpush2.msra.mxu0 0.0
  %1533 = vmatprep.subr.mxu0 0.0
  %1534 = vmatpush2.msra.mxu0 0.0
  %1535 = vmatprep.subr.mxu0 0.0
  %1536 = vmatpush2.msra.mxu0 0.0
  %1537 = vmatprep.subr.mxu0 0.0
  %1538 = vmatpush2.msra.mxu0 0.0
  %1539 = vmatprep.subr.mxu0 0.0
  %1540 = vmatpush2.msra.mxu0 0.0
  %1541 = vmatprep.subr.mxu0 0.0
  %1542 = vmatpush2.msra.mxu0 0.0
  %1543 = vmatprep.subr.mxu0 0.0
  %1544 = vmatpush2.msra.mxu0 0.0
  %1545 = vmatprep.subr.mxu0 0.0
  %1546 = vmatpush2.msra.mxu0 0.0
  %1547 = vmatprep.subr.mxu0 0.0
  %1548 = vmatpush2.msra.mxu0 0.0
  %1549 = vmatprep.subr.mxu0 0.0
  %1550 = vmatpush2.msra.mxu0 0.0
  %1551 = vmatprep.subr.mxu0 0.0
  %1552 = vmatpush2.msra.mxu0 0.0
  %1553 = vmatprep.subr.mxu0 0.0
  %1554 = vmatpush2.msra.mxu0 0.0
  %1555 = vmatprep.subr.mxu0 0.0
  %1556 = vmatpush2.msra.mxu0 0.0
  %1557 = vmatprep.subr.mxu0 0.0
  %1558 = vmatpush2.msra.mxu0 0.0
  %1559 = vmatprep.mubr.f32.mxu0 0.0
  %1560 = vmatmul.mubr.f32.gmra.mxu0 %v1493
  %v1561 = vpop.f32.mrf.mxu0
  %v1562 = vadd.f32 %v1491, %v1561
  %v1563 = vpop.f32.mrf.mxu0
  %1564 = vdwg.mxu0
  %vm1565 = vcmask 1024
  %1566 = vst.msk [vmem:[%s5] sm:$0x3] %vm1565, %v1562
  // Predicated region
  $region22: #{_lambda_.1} parent=0 // pred_check
    _
  $region23: #{_lambda_.1} parent=0 // pred_check_branch
    %1568 = sbr.rel (0) target = $region25
  $region24: #{_lambda_.1} parent=0 // pred_region
    _
  $region25: #{_lambda_.1} parent=0 // pred_fallthru
    _
  // Predicated region
  $region26: #{_lambda_.1} parent=0 // pred_check
    _
  $region27: #{_lambda_.1} parent=0 // pred_check_branch
    %1570 = sbr.rel (0) target = $region29
  $region28: #{_lambda_.1} parent=0 // pred_region
    _
  $region29: #{_lambda_.1} parent=0 // pred_fallthru
    _

</llo_original>
